<compile_context>
chip_gen: v6e
topology: v6e:2x2x1
jax: 0.10.0
libtpu: 0.0.40
codegen_flags: <defaults>
</compile_context>

<pallas_src>
import functools
import math

import jax
import jax.numpy as jnp
from jax.experimental import pallas as pl
from jax.experimental.pallas import tpu as pltpu

# MCAN config values with which FC is instantiated inside MLP / AttFlat.
HIDDEN_SIZE = 512      # FC in_size
FLAT_MLP_SIZE = 512    # FC out_size
DROPOUT_R = 0.1        # eval-mode identity here


def fc_kernel(x_ref, w_ref, b_ref, o_ref, *, use_relu):
    # Per-grid-step tiles:
    #   x_ref : (TM, IN)  f32      w_ref : (IN, OUT) f32
    #   b_ref : (1, OUT)  f32      o_ref : (TM, OUT) f32
    # bf16 operands feed the MXU natively; accumulate in f32.
    acc = jnp.dot(x_ref[...].astype(jnp.bfloat16),
                  w_ref[...].astype(jnp.bfloat16),
                  preferred_element_type=jnp.float32)
    acc = acc + b_ref[...]
    if use_relu:
        acc = jnp.maximum(acc, 0.0)
    # Dropout(p=dropout_r): eval-mode identity.
    o_ref[...] = acc.astype(o_ref.dtype)


def _round_up(x, m):
    return ((x + m - 1) // m) * m


def _pick_row_tile(n_rows, in_size, out_size, itemsize=4,
                   tile_budget_bytes=8 << 20):
    """Rows per grid step.

    Targets >=256 rows so the 256-wide MXU systolic array is filled
    (v6e/v7x), capped so double-buffered x/out tiles PLUS in-kernel
    temporaries (~another x/out tile worth of bf16 copies + acc) stay within
    the per-step VMEM budget.  If the whole (8-row padded) batch fits in one
    tile but has >=512 rows, split it into two steps so the "parallel" batch
    axis can shard across the two v7x TensorCores and the x DMA can pipeline.
    """
    row_bytes = (in_size + out_size) * itemsize
    tm = 512
    # 4x = double-buffered x/out blocks, +2x = in-kernel temporaries.
    while tm > 8 and 6 * tm * row_bytes > tile_budget_bytes:
        tm //= 2
    n8 = _round_up(max(n_rows, 1), 8)
    if n8 <= tm:
        if n8 >= 512:
            return _round_up(n8 // 2, 8)   # >=2 grid steps for v7x megacore
        return n8                          # whole padded batch in one tile
    return tm


def fc_forward(x, w, b, *, use_relu=True, dropout_r=DROPOUT_R):
    """FC forward: ReLU(x @ w + b), dropout as eval-mode identity.

    x: (..., in_size) f32; w: (in_size, out_size) f32; b: (out_size,) f32.
    Returns (..., out_size) f32.
    """
    del dropout_r  # eval-mode identity; kept for interface parity with the module
    in_size = x.shape[-1]
    out_size = w.shape[1]
    lead_shape = x.shape[:-1]
    n = math.prod(lead_shape) if lead_shape else 1
    x2 = x.reshape(n, in_size)
    b2 = b.reshape(1, out_size)

    itemsize = jnp.dtype(x.dtype).itemsize
    tm = _pick_row_tile(n, in_size, out_size, itemsize)
    n_pad = _round_up(_round_up(n, 8), tm)
    if n_pad != n:
        # Zero-padded rows are computed (harmless, row-independent) and sliced off.
        x2 = jnp.pad(x2, ((0, n_pad - n), (0, 0)))

    # VMEM estimate: double-buffered x/out tiles + ~1 tile of in-kernel
    # temporaries + weights (counted double-buffered to stay conservative even
    # if the Buffered(1) fallback is taken).
    tile_bytes = tm * (in_size + out_size) * itemsize
    weight_bytes = (in_size * out_size + out_size) * itemsize
    est_bytes = 6 * tile_bytes + 2 * weight_bytes
    try:
        vmem_cap = int(pltpu.get_tpu_info().vmem_capacity_bytes)
    except Exception:
        vmem_cap = 64 << 20  # v7x per-TC capacity as the safe lower bound
    vmem_limit = None
    if est_bytes > (16 << 20):  # tightest scoped default (v5e)
        vmem_limit = int(min(est_bytes + (8 << 20), int(vmem_cap * 0.9)))

    def _build(single_buffer_weights):
        def _const_spec(shape):
            if single_buffer_weights:
                return pl.BlockSpec(shape, lambda i: (0, 0),
                                    pipeline_mode=pl.Buffered(1))
            return pl.BlockSpec(shape, lambda i: (0, 0))

        return pl.pallas_call(
            functools.partial(fc_kernel, use_relu=use_relu),
            out_shape=jax.ShapeDtypeStruct((n_pad, out_size), x.dtype),
            grid_spec=pltpu.PrefetchScalarGridSpec(
                num_scalar_prefetch=0,
                grid=(n_pad // tm,),
                in_specs=[
                    pl.BlockSpec((tm, in_size), lambda i: (i, 0)),   # x rows
                    _const_spec((in_size, out_size)),                # w
                    _const_spec((1, out_size)),                      # b
                ],
                out_specs=pl.BlockSpec((tm, out_size), lambda i: (i, 0)),
            ),
            compiler_params=pltpu.CompilerParams(
                dimension_semantics=("parallel",),
                vmem_limit_bytes=vmem_limit),
        )

    try:
        out2 = _build(True)(x2, w, b2)
    except Exception:
        # Fallback: default (double) buffering for the constant weight blocks.
        out2 = _build(False)(x2, w, b2)

    out2 = out2[:n]
    return out2.reshape(*lead_shape, out_size)


def fc_ref(x, w, b, *, use_relu=True):
    # Pure-JAX reference of the PyTorch FC forward (eval mode).
    y = x @ w + b
    if use_relu:
        y = jax.nn.relu(y)
    return y


if __name__ == "__main__":
    key = jax.random.PRNGKey(0)
    k_x, k_w, k_b = jax.random.split(key, 3)

    # Small shapes consistent with how FC is used in MCAN:
    # FC(HIDDEN_SIZE=512 -> FLAT_MLP_SIZE=512, dropout_r=0.1, use_relu=True)
    # applied to (batch=2, seq=8, hidden=512).
    B, S = 2, 8
    IN, OUT = HIDDEN_SIZE, FLAT_MLP_SIZE

    x = jax.random.normal(k_x, (B, S, IN), jnp.float32)
    bound = 1.0 / (IN ** 0.5)   # nn.Linear default init range
    w = jax.random.uniform(k_w, (IN, OUT), jnp.float32, -bound, bound)
    b = jax.random.uniform(k_b, (OUT,), jnp.float32, -bound, bound)

    out = fc_forward(x, w, b, use_relu=True, dropout_r=DROPOUT_R)
    out = jax.block_until_ready(out)

    ref = fc_ref(x, w, b, use_relu=True)
    assert out.shape == (B, S, OUT)
    # bf16 MXU operands with f32 accumulation vs. the f32 reference:
    # per-output error is ~1e-3 typical (512-term dot), so 2e-2 is a safe,
    # bf16-appropriate tolerance.
    assert jnp.allclose(out, ref, rtol=2e-2, atol=2e-2), "mismatch vs reference"

    print("KERNEL_OK")
</pallas_src>

<mosaic_0001>
module attributes {stable_mosaic.version = 11 : i64} {
  func.func @fc_kernel(%arg0: i32, %arg1: memref<16x512xf32, #tpu.memory_space<vmem>>, %arg2: memref<512x512xf32, #tpu.memory_space<vmem>>, %arg3: memref<1x512xf32, #tpu.memory_space<vmem>>, %arg4: memref<16x512xf32, #tpu.memory_space<vmem>>) attributes {dimension_semantics = [#tpu.dimension_semantics<parallel>], iteration_bounds = array<i64: 1>, scalar_prefetch = 0 : i64, scratch_operands = 0 : i64, tpu.core_type = #tpu.core_type<tc>, window_params = [{transform_indices = @transform_0, window_bounds = array<i64: 16, 512>}, {pipeline_mode = #tpu.pipeline_mode<synchronous>, transform_indices = @transform_1, window_bounds = array<i64: 512, 512>}, {pipeline_mode = #tpu.pipeline_mode<synchronous>, transform_indices = @transform_2, window_bounds = array<i64: 1, 512>}, {transform_indices = @transform_3, window_bounds = array<i64: 16, 512>}]} {
    %c0 = arith.constant 0 : index
    %c0_0 = arith.constant 0 : index
    %0 = vector.load %arg1[%c0, %c0_0] : memref<16x512xf32, #tpu.memory_space<vmem>>, vector<16x512xf32>
    %1 = arith.truncf %0 : vector<16x512xf32> to vector<16x512xbf16>
    %c0_1 = arith.constant 0 : index
    %c0_2 = arith.constant 0 : index
    %2 = vector.load %arg2[%c0_1, %c0_2] : memref<512x512xf32, #tpu.memory_space<vmem>>, vector<512x512xf32>
    %3 = arith.truncf %2 : vector<512x512xf32> to vector<512x512xbf16>
    %cst = arith.constant dense<0.000000e+00> : vector<16x512xf32>
    %4 = tpu.matmul %1, %3, %cst {dimension_numbers = #tpu.dot_dimension_numbers<[1], [0], [0], [1], [0, 0, 1, 1], [], []>} : vector<16x512xbf16>, vector<512x512xbf16>, vector<16x512xf32> -> vector<16x512xf32>
    %c0_3 = arith.constant 0 : index
    %c0_4 = arith.constant 0 : index
    %5 = vector.load %arg3[%c0_3, %c0_4] : memref<1x512xf32, #tpu.memory_space<vmem>>, vector<1x512xf32>
    %6 = vector.broadcast %5 : vector<1x512xf32> to vector<16x512xf32>
    %7 = arith.addf %4, %6 : vector<16x512xf32>
    %cst_5 = arith.constant 0.000000e+00 : f32
    %8 = vector.broadcast %cst_5 : f32 to vector<16x512xf32>
    %9 = arith.maximumf %7, %8 : vector<16x512xf32>
    %c0_6 = arith.constant 0 : index
    %c0_7 = arith.constant 0 : index
    %10 = vector.load %arg4[%c0_6, %c0_7] : memref<16x512xf32, #tpu.memory_space<vmem>>, vector<16x512xf32>
    tpu.vector_store %arg4[%c0_6, %c0_7], %9 {strides = array<i32>} : memref<16x512xf32, #tpu.memory_space<vmem>>, vector<16x512xf32>,
    return
  }
  func.func @transform_0(%arg0: i32) -> (i32, i32) {
    %c0_i32 = arith.constant 0 : i32
    %c0_i32_0 = arith.constant 0 : i32
    return %arg0, %c0_i32 : i32, i32
  }
  func.func @transform_1(%arg0: i32) -> (i32, i32) {
    %c0_i32 = arith.constant 0 : i32
    %c0_i32_0 = arith.constant 0 : i32
    %c0_i32_1 = arith.constant 0 : i32
    return %c0_i32, %c0_i32_0 : i32, i32
  }
  func.func @transform_2(%arg0: i32) -> (i32, i32) {
    %c0_i32 = arith.constant 0 : i32
    %c0_i32_0 = arith.constant 0 : i32
    %c0_i32_1 = arith.constant 0 : i32
    return %c0_i32, %c0_i32_0 : i32, i32
  }
  func.func @transform_3(%arg0: i32) -> (i32, i32) {
    %c0_i32 = arith.constant 0 : i32
    %c0_i32_0 = arith.constant 0 : i32
    return %arg0, %c0_i32 : i32, i32
  }
}

module attributes {stable_mosaic.version = 11 : i64} {
  func.func @fc_kernel(%arg0: i32, %arg1: memref<16x512xf32, #tpu.memory_space<vmem>>, %arg2: memref<512x512xf32, #tpu.memory_space<vmem>>, %arg3: memref<1x512xf32, #tpu.memory_space<vmem>>, %arg4: memref<16x512xf32, #tpu.memory_space<vmem>>) attributes {dimension_semantics = [#tpu.dimension_semantics<parallel>], iteration_bounds = array<i64: 1>, scalar_prefetch = 0 : i64, scratch_operands = 0 : i64, tpu.core_type = #tpu.core_type<tc>, window_params = [{transform_indices = @transform_0, window_bounds = array<i64: 16, 512>}, {pipeline_mode = #tpu.pipeline_mode<synchronous>, transform_indices = @transform_1, window_bounds = array<i64: 512, 512>}, {pipeline_mode = #tpu.pipeline_mode<synchronous>, transform_indices = @transform_2, window_bounds = array<i64: 1, 512>}, {transform_indices = @transform_3, window_bounds = array<i64: 16, 512>}]} {
    %c0 = arith.constant 0 : index
    %c0_0 = arith.constant 0 : index
    %0 = vector.load %arg1[%c0, %c0_0] : memref<16x512xf32, #tpu.memory_space<vmem>>, vector<16x512xf32>
    %1 = arith.truncf %0 : vector<16x512xf32> to vector<16x512xbf16>
    %c0_1 = arith.constant 0 : index
    %c0_2 = arith.constant 0 : index
    %2 = vector.load %arg2[%c0_1, %c0_2] : memref<512x512xf32, #tpu.memory_space<vmem>>, vector<512x512xf32>
    %3 = arith.truncf %2 : vector<512x512xf32> to vector<512x512xbf16>
    %cst = arith.constant dense<0.000000e+00> : vector<16x512xf32>
    %4 = tpu.matmul %1, %3, %cst {dimension_numbers = #tpu.dot_dimension_numbers<[1], [0], [0], [1], [0, 0, 1, 1], [], []>} : vector<16x512xbf16>, vector<512x512xbf16>, vector<16x512xf32> -> vector<16x512xf32>
    %c0_3 = arith.constant 0 : index
    %c0_4 = arith.constant 0 : index
    %5 = vector.load %arg3[%c0_3, %c0_4] : memref<1x512xf32, #tpu.memory_space<vmem>>, vector<1x512xf32>
    %6 = vector.broadcast %5 : vector<1x512xf32> to vector<16x512xf32>
    %7 = arith.addf %4, %6 : vector<16x512xf32>
    %cst_5 = arith.constant 0.000000e+00 : f32
    %8 = vector.broadcast %cst_5 : f32 to vector<16x512xf32>
    %9 = arith.maximumf %7, %8 : vector<16x512xf32>
    %c0_6 = arith.constant 0 : index
    %c0_7 = arith.constant 0 : index
    %10 = vector.load %arg4[%c0_6, %c0_7] : memref<16x512xf32, #tpu.memory_space<vmem>>, vector<16x512xf32>
    tpu.vector_store %arg4[%c0_6, %c0_7], %9 {strides = array<i32>} : memref<16x512xf32, #tpu.memory_space<vmem>>, vector<16x512xf32>,
    return
  }
  func.func @transform_0(%arg0: i32) -> (i32, i32) {
    %c0_i32 = arith.constant 0 : i32
    %c0_i32_0 = arith.constant 0 : i32
    return %arg0, %c0_i32 : i32, i32
  }
  func.func @transform_1(%arg0: i32) -> (i32, i32) {
    %c0_i32 = arith.constant 0 : i32
    %c0_i32_0 = arith.constant 0 : i32
    %c0_i32_1 = arith.constant 0 : i32
    return %c0_i32, %c0_i32_0 : i32, i32
  }
  func.func @transform_2(%arg0: i32) -> (i32, i32) {
    %c0_i32 = arith.constant 0 : i32
    %c0_i32_0 = arith.constant 0 : i32
    %c0_i32_1 = arith.constant 0 : i32
    return %c0_i32, %c0_i32_0 : i32, i32
  }
  func.func @transform_3(%arg0: i32) -> (i32, i32) {
    %c0_i32 = arith.constant 0 : i32
    %c0_i32_0 = arith.constant 0 : i32
    return %arg0, %c0_i32 : i32, i32
  }
}

</mosaic_0001>

<llo_original>
// kernel: tpu_custom_call.1
$region0: #{tpu_custom_call.1}
  #allocation0 [shape = 'u32[]', space=smem, size = 0x4, offset = 0x4, fixed_abs, tag = 'smem constant byte address 0x4 - core index']
  #allocation1 [shape = 'u32[144,128]{1,0:T(1,128)}', space=vmem, size = 0x12000, scoped, tag = 'internal scratch']
  %s0 = inlined_call_operand.hbm [shape: f32[16,512], index: 0, kind: input, shape index: {}]
  %s1 = inlined_call_operand.hbm [shape: f32[512,512], index: 1, kind: input, shape index: {}]
  %s2 = inlined_call_operand.hbm [shape: f32[1,512], index: 2, kind: input, shape index: {}]
  %s3 = inlined_call_operand.hbm [shape: f32[16,512], index: 3, kind: output, shape index: {}]
  %s4 = sld [smem:[#allocation0]]
  $region34: #{tpu_custom_call.1} parent=0
    _
  %s6 = ssub.s32 1, %s4
  %s7 = scalar_select 0, %s6, %s4
  $region1: #{tpu_custom_call.1} parent=0
    #allocation2 [shape = 'u8[32768]{0}', space=vmem, size = 0x8000, scoped, tag = 'input window, operand 0, single buffered']
    #allocation3 [shape = 's32[1]{0}', space=sflag, size = 0x4, scoped, tag = 'scoped memory for tpu_custom_call.1']
    #allocation4 [shape = 's32[1]{0}', space=sflag, size = 0x4, scoped, tag = 'scoped memory for tpu_custom_call.1']
    #allocation5 [shape = 'u8[1048576]{0}', space=vmem, size = 0x100000, scoped, tag = 'input window, operand 1, single buffered']
    #allocation6 [shape = 's32[1]{0}', space=sflag, size = 0x4, scoped, tag = 'scoped memory for tpu_custom_call.1']
    #allocation7 [shape = 'u8[2048]{0}', space=vmem, size = 0x800, scoped, tag = 'input window, operand 2, single buffered']
    #allocation8 [shape = 'u8[32768]{0}', space=vmem, size = 0x8000, scoped, tag = 'output window, operand 0, single buffered']
    %8 = vsyncpa [#allocation3], 0
    %9 = vsyncpa [#allocation6], 0
    %10 = vsyncpa [#allocation4], 0
    // Predicated region
    $region2: #{tpu_custom_call.1} parent=1 // pred_check
      _
    $region3: #{tpu_custom_call.1} parent=1 // pred_check_branch
      %12 = sbr.rel (0) target = $region5
    $region4: #{tpu_custom_call.1} parent=1 // pred_region
      %s14 = ssub.s32 1024, 1024
      %15 = vsyncadd [#allocation3], %s14
      %s16 = sshll.u32 [#allocation2], 4
      %s17 = int_to_ptr.vmem [resolvable:$true] %s16
      %22 = dma.hbm_to_vmem [thread:$0]  %s0, 1024, %s17, [#allocation3], 512, 512, 32
    $region5: #{tpu_custom_call.1} parent=1 // pred_fallthru
      _
    // Predicated region
    $region6: #{tpu_custom_call.1} parent=1 // pred_check
      _
    $region7: #{tpu_custom_call.1} parent=1 // pred_check_branch
      %24 = sbr.rel (0) target = $region9
    $region8: #{tpu_custom_call.1} parent=1 // pred_region
      %s26 = ssub.s32 32768, 32768
      %27 = vsyncadd [#allocation6], %s26
      %s28 = sshll.u32 [#allocation5], 4
      %s29 = int_to_ptr.vmem [resolvable:$true] %s28
      %34 = dma.hbm_to_vmem [thread:$0]  %s1, 32768, %s29, [#allocation6], 512, 512, 32
    $region9: #{tpu_custom_call.1} parent=1 // pred_fallthru
      _
    // Predicated region
    $region10: #{tpu_custom_call.1} parent=1 // pred_check
      _
    $region11: #{tpu_custom_call.1} parent=1 // pred_check_branch
      %36 = sbr.rel (0) target = $region13
    $region12: #{tpu_custom_call.1} parent=1 // pred_region
      %s38 = ssub.s32 64, 64
      %39 = vsyncadd [#allocation6], %s38
      %s41 = sshll.u32 [#allocation7], 4
      %s42 = int_to_ptr.vmem [resolvable:$true] %s41
      %44 = dma.hbm_to_vmem [thread:$0]  %s2, 64, %s42, [#allocation6]
    $region13: #{tpu_custom_call.1} parent=1 // pred_fallthru
      _
    // Predicated region
    $region14: #{tpu_custom_call.1} parent=1 // pred_check
      _
    $region15: #{tpu_custom_call.1} parent=1 // pred_check_branch
      %46 = sbr.rel (0) target = $region17
    $region16: #{tpu_custom_call.1} parent=1 // pred_region
      %47 = dma.done [#allocation3], 1024
    $region17: #{tpu_custom_call.1} parent=1 // pred_fallthru
      _
    // Predicated region
    $region18: #{tpu_custom_call.1} parent=1 // pred_check
      _
    $region19: #{tpu_custom_call.1} parent=1 // pred_check_branch
      %49 = sbr.rel (0) target = $region21
    $region20: #{tpu_custom_call.1} parent=1 // pred_region
      %50 = dma.done [#allocation6], 32768
    $region21: #{tpu_custom_call.1} parent=1 // pred_fallthru
      _
    // Predicated region
    $region22: #{tpu_custom_call.1} parent=1 // pred_check
      _
    $region23: #{tpu_custom_call.1} parent=1 // pred_check_branch
      %52 = sbr.rel (0) target = $region25
    $region24: #{tpu_custom_call.1} parent=1 // pred_region
      %53 = dma.done [#allocation6], 64
    $region25: #{tpu_custom_call.1} parent=1 // pred_fallthru
      _
    %v54 = vld [vmem:[#allocation2] sm:$0xff]
    %v55 = vld [vmem:[#allocation2 + $0x8] sm:$0xff]
    %v56 = vld [vmem:[#allocation2 + $0x10] sm:$0xff]
    %v57 = vld [vmem:[#allocation2 + $0x18] sm:$0xff]
    %v58 = vld [vmem:[#allocation2 + $0x20] sm:$0xff]
    %v59 = vld [vmem:[#allocation2 + $0x28] sm:$0xff]
    %v60 = vld [vmem:[#allocation2 + $0x30] sm:$0xff]
    %v61 = vld [vmem:[#allocation2 + $0x38] sm:$0xff]
    %v62 = vpack.c.bf16 %v58, %v54
    %v63 = vpack.c.bf16 %v59, %v55
    %v64 = vpack.c.bf16 %v60, %v56
    %v65 = vpack.c.bf16 %v61, %v57
    %v66 = vld [vmem:[#allocation5] sm:$0xff]
    %v67 = vld [vmem:[#allocation5 + $0x8] sm:$0xff]
    %v68 = vld [vmem:[#allocation5 + $0x10] sm:$0xff]
    %v69 = vld [vmem:[#allocation5 + $0x18] sm:$0xff]
    %v70 = vld [vmem:[#allocation5 + $0x20] sm:$0xff]
    %v71 = vld [vmem:[#allocation5 + $0x28] sm:$0xff]
    %v72 = vld [vmem:[#allocation5 + $0x30] sm:$0xff]
    %v73 = vld [vmem:[#allocation5 + $0x38] sm:$0xff]
    %v74 = vld [vmem:[#allocation5 + $0x40] sm:$0xff]
    %v75 = vld [vmem:[#allocation5 + $0x48] sm:$0xff]
    %v76 = vld [vmem:[#allocation5 + $0x50] sm:$0xff]
    %v77 = vld [vmem:[#allocation5 + $0x58] sm:$0xff]
    %v78 = vld [vmem:[#allocation5 + $0x60] sm:$0xff]
    %v79 = vld [vmem:[#allocation5 + $0x68] sm:$0xff]
    %v80 = vld [vmem:[#allocation5 + $0x70] sm:$0xff]
    %v81 = vld [vmem:[#allocation5 + $0x78] sm:$0xff]
    %v82 = vld [vmem:[#allocation5 + $0x80] sm:$0xff]
    %v83 = vld [vmem:[#allocation5 + $0x88] sm:$0xff]
    %v84 = vld [vmem:[#allocation5 + $0x90] sm:$0xff]
    %v85 = vld [vmem:[#allocation5 + $0x98] sm:$0xff]
    %v86 = vld [vmem:[#allocation5 + $0xa0] sm:$0xff]
    %v87 = vld [vmem:[#allocation5 + $0xa8] sm:$0xff]
    %v88 = vld [vmem:[#allocation5 + $0xb0] sm:$0xff]
    %v89 = vld [vmem:[#allocation5 + $0xb8] sm:$0xff]
    %v90 = vld [vmem:[#allocation5 + $0xc0] sm:$0xff]
    %v91 = vld [vmem:[#allocation5 + $0xc8] sm:$0xff]
    %v92 = vld [vmem:[#allocation5 + $0xd0] sm:$0xff]
    %v93 = vld [vmem:[#allocation5 + $0xd8] sm:$0xff]
    %v94 = vld [vmem:[#allocation5 + $0xe0] sm:$0xff]
    %v95 = vld [vmem:[#allocation5 + $0xe8] sm:$0xff]
    %v96 = vld [vmem:[#allocation5 + $0xf0] sm:$0xff]
    %v97 = vld [vmem:[#allocation5 + $0xf8] sm:$0xff]
    %v98 = vld [vmem:[#allocation5 + $0x100] sm:$0xff]
    %v99 = vld [vmem:[#allocation5 + $0x108] sm:$0xff]
    %v100 = vld [vmem:[#allocation5 + $0x110] sm:$0xff]
    %v101 = vld [vmem:[#allocation5 + $0x118] sm:$0xff]
    %v102 = vld [vmem:[#allocation5 + $0x120] sm:$0xff]
    %v103 = vld [vmem:[#allocation5 + $0x128] sm:$0xff]
    %v104 = vld [vmem:[#allocation5 + $0x130] sm:$0xff]
    %v105 = vld [vmem:[#allocation5 + $0x138] sm:$0xff]
    %v106 = vld [vmem:[#allocation5 + $0x140] sm:$0xff]
    %v107 = vld [vmem:[#allocation5 + $0x148] sm:$0xff]
    %v108 = vld [vmem:[#allocation5 + $0x150] sm:$0xff]
    %v109 = vld [vmem:[#allocation5 + $0x158] sm:$0xff]
    %v110 = vld [vmem:[#allocation5 + $0x160] sm:$0xff]
    %v111 = vld [vmem:[#allocation5 + $0x168] sm:$0xff]
    %v112 = vld [vmem:[#allocation5 + $0x170] sm:$0xff]
    %v113 = vld [vmem:[#allocation5 + $0x178] sm:$0xff]
    %v114 = vld [vmem:[#allocation5 + $0x180] sm:$0xff]
    %v115 = vld [vmem:[#allocation5 + $0x188] sm:$0xff]
    %v116 = vld [vmem:[#allocation5 + $0x190] sm:$0xff]
    %v117 = vld [vmem:[#allocation5 + $0x198] sm:$0xff]
    %v118 = vld [vmem:[#allocation5 + $0x1a0] sm:$0xff]
    %v119 = vld [vmem:[#allocation5 + $0x1a8] sm:$0xff]
    %v120 = vld [vmem:[#allocation5 + $0x1b0] sm:$0xff]
    %v121 = vld [vmem:[#allocation5 + $0x1b8] sm:$0xff]
    %v122 = vld [vmem:[#allocation5 + $0x1c0] sm:$0xff]
    %v123 = vld [vmem:[#allocation5 + $0x1c8] sm:$0xff]
    %v124 = vld [vmem:[#allocation5 + $0x1d0] sm:$0xff]
    %v125 = vld [vmem:[#allocation5 + $0x1d8] sm:$0xff]
    %v126 = vld [vmem:[#allocation5 + $0x1e0] sm:$0xff]
    %v127 = vld [vmem:[#allocation5 + $0x1e8] sm:$0xff]
    %v128 = vld [vmem:[#allocation5 + $0x1f0] sm:$0xff]
    %v129 = vld [vmem:[#allocation5 + $0x1f8] sm:$0xff]
    %v130 = vld [vmem:[#allocation5 + $0x200] sm:$0xff]
    %v131 = vld [vmem:[#allocation5 + $0x208] sm:$0xff]
    %v132 = vld [vmem:[#allocation5 + $0x210] sm:$0xff]
    %v133 = vld [vmem:[#allocation5 + $0x218] sm:$0xff]
    %v134 = vld [vmem:[#allocation5 + $0x220] sm:$0xff]
    %v135 = vld [vmem:[#allocation5 + $0x228] sm:$0xff]
    %v136 = vld [vmem:[#allocation5 + $0x230] sm:$0xff]
    %v137 = vld [vmem:[#allocation5 + $0x238] sm:$0xff]
    %v138 = vld [vmem:[#allocation5 + $0x240] sm:$0xff]
    %v139 = vld [vmem:[#allocation5 + $0x248] sm:$0xff]
    %v140 = vld [vmem:[#allocation5 + $0x250] sm:$0xff]
    %v141 = vld [vmem:[#allocation5 + $0x258] sm:$0xff]
    %v142 = vld [vmem:[#allocation5 + $0x260] sm:$0xff]
    %v143 = vld [vmem:[#allocation5 + $0x268] sm:$0xff]
    %v144 = vld [vmem:[#allocation5 + $0x270] sm:$0xff]
    %v145 = vld [vmem:[#allocation5 + $0x278] sm:$0xff]
    %v146 = vld [vmem:[#allocation5 + $0x280] sm:$0xff]
    %v147 = vld [vmem:[#allocation5 + $0x288] sm:$0xff]
    %v148 = vld [vmem:[#allocation5 + $0x290] sm:$0xff]
    %v149 = vld [vmem:[#allocation5 + $0x298] sm:$0xff]
    %v150 = vld [vmem:[#allocation5 + $0x2a0] sm:$0xff]
    %v151 = vld [vmem:[#allocation5 + $0x2a8] sm:$0xff]
    %v152 = vld [vmem:[#allocation5 + $0x2b0] sm:$0xff]
    %v153 = vld [vmem:[#allocation5 + $0x2b8] sm:$0xff]
    %v154 = vld [vmem:[#allocation5 + $0x2c0] sm:$0xff]
    %v155 = vld [vmem:[#allocation5 + $0x2c8] sm:$0xff]
    %v156 = vld [vmem:[#allocation5 + $0x2d0] sm:$0xff]
    %v157 = vld [vmem:[#allocation5 + $0x2d8] sm:$0xff]
    %v158 = vld [vmem:[#allocation5 + $0x2e0] sm:$0xff]
    %v159 = vld [vmem:[#allocation5 + $0x2e8] sm:$0xff]
    %v160 = vld [vmem:[#allocation5 + $0x2f0] sm:$0xff]
    %v161 = vld [vmem:[#allocation5 + $0x2f8] sm:$0xff]
    %v162 = vld [vmem:[#allocation5 + $0x300] sm:$0xff]
    %v163 = vld [vmem:[#allocation5 + $0x308] sm:$0xff]
    %v164 = vld [vmem:[#allocation5 + $0x310] sm:$0xff]
    %v165 = vld [vmem:[#allocation5 + $0x318] sm:$0xff]
    %v166 = vld [vmem:[#allocation5 + $0x320] sm:$0xff]
    %v167 = vld [vmem:[#allocation5 + $0x328] sm:$0xff]
    %v168 = vld [vmem:[#allocation5 + $0x330] sm:$0xff]
    %v169 = vld [vmem:[#allocation5 + $0x338] sm:$0xff]
    %v170 = vld [vmem:[#allocation5 + $0x340] sm:$0xff]
    %v171 = vld [vmem:[#allocation5 + $0x348] sm:$0xff]
    %v172 = vld [vmem:[#allocation5 + $0x350] sm:$0xff]
    %v173 = vld [vmem:[#allocation5 + $0x358] sm:$0xff]
    %v174 = vld [vmem:[#allocation5 + $0x360] sm:$0xff]
    %v175 = vld [vmem:[#allocation5 + $0x368] sm:$0xff]
    %v176 = vld [vmem:[#allocation5 + $0x370] sm:$0xff]
    %v177 = vld [vmem:[#allocation5 + $0x378] sm:$0xff]
    %v178 = vld [vmem:[#allocation5 + $0x380] sm:$0xff]
    %v179 = vld [vmem:[#allocation5 + $0x388] sm:$0xff]
    %v180 = vld [vmem:[#allocation5 + $0x390] sm:$0xff]
    %v181 = vld [vmem:[#allocation5 + $0x398] sm:$0xff]
    %v182 = vld [vmem:[#allocation5 + $0x3a0] sm:$0xff]
    %v183 = vld [vmem:[#allocation5 + $0x3a8] sm:$0xff]
    %v184 = vld [vmem:[#allocation5 + $0x3b0] sm:$0xff]
    %v185 = vld [vmem:[#allocation5 + $0x3b8] sm:$0xff]
    %v186 = vld [vmem:[#allocation5 + $0x3c0] sm:$0xff]
    %v187 = vld [vmem:[#allocation5 + $0x3c8] sm:$0xff]
    %v188 = vld [vmem:[#allocation5 + $0x3d0] sm:$0xff]
    %v189 = vld [vmem:[#allocation5 + $0x3d8] sm:$0xff]
    %v190 = vld [vmem:[#allocation5 + $0x3e0] sm:$0xff]
    %v191 = vld [vmem:[#allocation5 + $0x3e8] sm:$0xff]
    %v192 = vld [vmem:[#allocation5 + $0x3f0] sm:$0xff]
    %v193 = vld [vmem:[#allocation5 + $0x3f8] sm:$0xff]
    %v194 = vld [vmem:[#allocation5 + $0x400] sm:$0xff]
    %v195 = vld [vmem:[#allocation5 + $0x408] sm:$0xff]
    %v196 = vld [vmem:[#allocation5 + $0x410] sm:$0xff]
    %v197 = vld [vmem:[#allocation5 + $0x418] sm:$0xff]
    %v198 = vld [vmem:[#allocation5 + $0x420] sm:$0xff]
    %v199 = vld [vmem:[#allocation5 + $0x428] sm:$0xff]
    %v200 = vld [vmem:[#allocation5 + $0x430] sm:$0xff]
    %v201 = vld [vmem:[#allocation5 + $0x438] sm:$0xff]
    %v202 = vld [vmem:[#allocation5 + $0x440] sm:$0xff]
    %v203 = vld [vmem:[#allocation5 + $0x448] sm:$0xff]
    %v204 = vld [vmem:[#allocation5 + $0x450] sm:$0xff]
    %v205 = vld [vmem:[#allocation5 + $0x458] sm:$0xff]
    %v206 = vld [vmem:[#allocation5 + $0x460] sm:$0xff]
    %v207 = vld [vmem:[#allocation5 + $0x468] sm:$0xff]
    %v208 = vld [vmem:[#allocation5 + $0x470] sm:$0xff]
    %v209 = vld [vmem:[#allocation5 + $0x478] sm:$0xff]
    %v210 = vld [vmem:[#allocation5 + $0x480] sm:$0xff]
    %v211 = vld [vmem:[#allocation5 + $0x488] sm:$0xff]
    %v212 = vld [vmem:[#allocation5 + $0x490] sm:$0xff]
    %v213 = vld [vmem:[#allocation5 + $0x498] sm:$0xff]
    %v214 = vld [vmem:[#allocation5 + $0x4a0] sm:$0xff]
    %v215 = vld [vmem:[#allocation5 + $0x4a8] sm:$0xff]
    %v216 = vld [vmem:[#allocation5 + $0x4b0] sm:$0xff]
    %v217 = vld [vmem:[#allocation5 + $0x4b8] sm:$0xff]
    %v218 = vld [vmem:[#allocation5 + $0x4c0] sm:$0xff]
    %v219 = vld [vmem:[#allocation5 + $0x4c8] sm:$0xff]
    %v220 = vld [vmem:[#allocation5 + $0x4d0] sm:$0xff]
    %v221 = vld [vmem:[#allocation5 + $0x4d8] sm:$0xff]
    %v222 = vld [vmem:[#allocation5 + $0x4e0] sm:$0xff]
    %v223 = vld [vmem:[#allocation5 + $0x4e8] sm:$0xff]
    %v224 = vld [vmem:[#allocation5 + $0x4f0] sm:$0xff]
    %v225 = vld [vmem:[#allocation5 + $0x4f8] sm:$0xff]
    %v226 = vld [vmem:[#allocation5 + $0x500] sm:$0xff]
    %v227 = vld [vmem:[#allocation5 + $0x508] sm:$0xff]
    %v228 = vld [vmem:[#allocation5 + $0x510] sm:$0xff]
    %v229 = vld [vmem:[#allocation5 + $0x518] sm:$0xff]
    %v230 = vld [vmem:[#allocation5 + $0x520] sm:$0xff]
    %v231 = vld [vmem:[#allocation5 + $0x528] sm:$0xff]
    %v232 = vld [vmem:[#allocation5 + $0x530] sm:$0xff]
    %v233 = vld [vmem:[#allocation5 + $0x538] sm:$0xff]
    %v234 = vld [vmem:[#allocation5 + $0x540] sm:$0xff]
    %v235 = vld [vmem:[#allocation5 + $0x548] sm:$0xff]
    %v236 = vld [vmem:[#allocation5 + $0x550] sm:$0xff]
    %v237 = vld [vmem:[#allocation5 + $0x558] sm:$0xff]
    %v238 = vld [vmem:[#allocation5 + $0x560] sm:$0xff]
    %v239 = vld [vmem:[#allocation5 + $0x568] sm:$0xff]
    %v240 = vld [vmem:[#allocation5 + $0x570] sm:$0xff]
    %v241 = vld [vmem:[#allocation5 + $0x578] sm:$0xff]
    %v242 = vld [vmem:[#allocation5 + $0x580] sm:$0xff]
    %v243 = vld [vmem:[#allocation5 + $0x588] sm:$0xff]
    %v244 = vld [vmem:[#allocation5 + $0x590] sm:$0xff]
    %v245 = vld [vmem:[#allocation5 + $0x598] sm:$0xff]
    %v246 = vld [vmem:[#allocation5 + $0x5a0] sm:$0xff]
    %v247 = vld [vmem:[#allocation5 + $0x5a8] sm:$0xff]
    %v248 = vld [vmem:[#allocation5 + $0x5b0] sm:$0xff]
    %v249 = vld [vmem:[#allocation5 + $0x5b8] sm:$0xff]
    %v250 = vld [vmem:[#allocation5 + $0x5c0] sm:$0xff]
    %v251 = vld [vmem:[#allocation5 + $0x5c8] sm:$0xff]
    %v252 = vld [vmem:[#allocation5 + $0x5d0] sm:$0xff]
    %v253 = vld [vmem:[#allocation5 + $0x5d8] sm:$0xff]
    %v254 = vld [vmem:[#allocation5 + $0x5e0] sm:$0xff]
    %v255 = vld [vmem:[#allocation5 + $0x5e8] sm:$0xff]
    %v256 = vld [vmem:[#allocation5 + $0x5f0] sm:$0xff]
    %v257 = vld [vmem:[#allocation5 + $0x5f8] sm:$0xff]
    %v258 = vld [vmem:[#allocation5 + $0x600] sm:$0xff]
    %v259 = vld [vmem:[#allocation5 + $0x608] sm:$0xff]
    %v260 = vld [vmem:[#allocation5 + $0x610] sm:$0xff]
    %v261 = vld [vmem:[#allocation5 + $0x618] sm:$0xff]
    %v262 = vld [vmem:[#allocation5 + $0x620] sm:$0xff]
    %v263 = vld [vmem:[#allocation5 + $0x628] sm:$0xff]
    %v264 = vld [vmem:[#allocation5 + $0x630] sm:$0xff]
    %v265 = vld [vmem:[#allocation5 + $0x638] sm:$0xff]
    %v266 = vld [vmem:[#allocation5 + $0x640] sm:$0xff]
    %v267 = vld [vmem:[#allocation5 + $0x648] sm:$0xff]
    %v268 = vld [vmem:[#allocation5 + $0x650] sm:$0xff]
    %v269 = vld [vmem:[#allocation5 + $0x658] sm:$0xff]
    %v270 = vld [vmem:[#allocation5 + $0x660] sm:$0xff]
    %v271 = vld [vmem:[#allocation5 + $0x668] sm:$0xff]
    %v272 = vld [vmem:[#allocation5 + $0x670] sm:$0xff]
    %v273 = vld [vmem:[#allocation5 + $0x678] sm:$0xff]
    %v274 = vld [vmem:[#allocation5 + $0x680] sm:$0xff]
    %v275 = vld [vmem:[#allocation5 + $0x688] sm:$0xff]
    %v276 = vld [vmem:[#allocation5 + $0x690] sm:$0xff]
    %v277 = vld [vmem:[#allocation5 + $0x698] sm:$0xff]
    %v278 = vld [vmem:[#allocation5 + $0x6a0] sm:$0xff]
    %v279 = vld [vmem:[#allocation5 + $0x6a8] sm:$0xff]
    %v280 = vld [vmem:[#allocation5 + $0x6b0] sm:$0xff]
    %v281 = vld [vmem:[#allocation5 + $0x6b8] sm:$0xff]
    %v282 = vld [vmem:[#allocation5 + $0x6c0] sm:$0xff]
    %v283 = vld [vmem:[#allocation5 + $0x6c8] sm:$0xff]
    %v284 = vld [vmem:[#allocation5 + $0x6d0] sm:$0xff]
    %v285 = vld [vmem:[#allocation5 + $0x6d8] sm:$0xff]
    %v286 = vld [vmem:[#allocation5 + $0x6e0] sm:$0xff]
    %v287 = vld [vmem:[#allocation5 + $0x6e8] sm:$0xff]
    %v288 = vld [vmem:[#allocation5 + $0x6f0] sm:$0xff]
    %v289 = vld [vmem:[#allocation5 + $0x6f8] sm:$0xff]
    %v290 = vld [vmem:[#allocation5 + $0x700] sm:$0xff]
    %v291 = vld [vmem:[#allocation5 + $0x708] sm:$0xff]
    %v292 = vld [vmem:[#allocation5 + $0x710] sm:$0xff]
    %v293 = vld [vmem:[#allocation5 + $0x718] sm:$0xff]
    %v294 = vld [vmem:[#allocation5 + $0x720] sm:$0xff]
    %v295 = vld [vmem:[#allocation5 + $0x728] sm:$0xff]
    %v296 = vld [vmem:[#allocation5 + $0x730] sm:$0xff]
    %v297 = vld [vmem:[#allocation5 + $0x738] sm:$0xff]
    %v298 = vld [vmem:[#allocation5 + $0x740] sm:$0xff]
    %v299 = vld [vmem:[#allocation5 + $0x748] sm:$0xff]
    %v300 = vld [vmem:[#allocation5 + $0x750] sm:$0xff]
    %v301 = vld [vmem:[#allocation5 + $0x758] sm:$0xff]
    %v302 = vld [vmem:[#allocation5 + $0x760] sm:$0xff]
    %v303 = vld [vmem:[#allocation5 + $0x768] sm:$0xff]
    %v304 = vld [vmem:[#allocation5 + $0x770] sm:$0xff]
    %v305 = vld [vmem:[#allocation5 + $0x778] sm:$0xff]
    %v306 = vld [vmem:[#allocation5 + $0x780] sm:$0xff]
    %v307 = vld [vmem:[#allocation5 + $0x788] sm:$0xff]
    %v308 = vld [vmem:[#allocation5 + $0x790] sm:$0xff]
    %v309 = vld [vmem:[#allocation5 + $0x798] sm:$0xff]
    %v310 = vld [vmem:[#allocation5 + $0x7a0] sm:$0xff]
    %v311 = vld [vmem:[#allocation5 + $0x7a8] sm:$0xff]
    %v312 = vld [vmem:[#allocation5 + $0x7b0] sm:$0xff]
    %v313 = vld [vmem:[#allocation5 + $0x7b8] sm:$0xff]
    %v314 = vld [vmem:[#allocation5 + $0x7c0] sm:$0xff]
    %v315 = vld [vmem:[#allocation5 + $0x7c8] sm:$0xff]
    %v316 = vld [vmem:[#allocation5 + $0x7d0] sm:$0xff]
    %v317 = vld [vmem:[#allocation5 + $0x7d8] sm:$0xff]
    %v318 = vld [vmem:[#allocation5 + $0x7e0] sm:$0xff]
    %v319 = vld [vmem:[#allocation5 + $0x7e8] sm:$0xff]
    %v320 = vld [vmem:[#allocation5 + $0x7f0] sm:$0xff]
    %v321 = vld [vmem:[#allocation5 + $0x7f8] sm:$0xff]
    %v322 = vpack.c.bf16 %v70, %v66
    %v323 = vpack.c.bf16 %v71, %v67
    %v324 = vpack.c.bf16 %v72, %v68
    %v325 = vpack.c.bf16 %v73, %v69
    %v326 = vpack.c.bf16 %v78, %v74
    %v327 = vpack.c.bf16 %v79, %v75
    %v328 = vpack.c.bf16 %v80, %v76
    %v329 = vpack.c.bf16 %v81, %v77
    %v330 = vpack.c.bf16 %v86, %v82
    %v331 = vpack.c.bf16 %v87, %v83
    %v332 = vpack.c.bf16 %v88, %v84
    %v333 = vpack.c.bf16 %v89, %v85
    %v334 = vpack.c.bf16 %v94, %v90
    %v335 = vpack.c.bf16 %v95, %v91
    %v336 = vpack.c.bf16 %v96, %v92
    %v337 = vpack.c.bf16 %v97, %v93
    %v338 = vpack.c.bf16 %v102, %v98
    %v339 = vpack.c.bf16 %v103, %v99
    %v340 = vpack.c.bf16 %v104, %v100
    %v341 = vpack.c.bf16 %v105, %v101
    %v342 = vpack.c.bf16 %v110, %v106
    %v343 = vpack.c.bf16 %v111, %v107
    %v344 = vpack.c.bf16 %v112, %v108
    %v345 = vpack.c.bf16 %v113, %v109
    %v346 = vpack.c.bf16 %v118, %v114
    %v347 = vpack.c.bf16 %v119, %v115
    %v348 = vpack.c.bf16 %v120, %v116
    %v349 = vpack.c.bf16 %v121, %v117
    %v350 = vpack.c.bf16 %v126, %v122
    %v351 = vpack.c.bf16 %v127, %v123
    %v352 = vpack.c.bf16 %v128, %v124
    %v353 = vpack.c.bf16 %v129, %v125
    %v354 = vpack.c.bf16 %v134, %v130
    %v355 = vpack.c.bf16 %v135, %v131
    %v356 = vpack.c.bf16 %v136, %v132
    %v357 = vpack.c.bf16 %v137, %v133
    %v358 = vpack.c.bf16 %v142, %v138
    %v359 = vpack.c.bf16 %v143, %v139
    %v360 = vpack.c.bf16 %v144, %v140
    %v361 = vpack.c.bf16 %v145, %v141
    %v362 = vpack.c.bf16 %v150, %v146
    %v363 = vpack.c.bf16 %v151, %v147
    %v364 = vpack.c.bf16 %v152, %v148
    %v365 = vpack.c.bf16 %v153, %v149
    %v366 = vpack.c.bf16 %v158, %v154
    %v367 = vpack.c.bf16 %v159, %v155
    %v368 = vpack.c.bf16 %v160, %v156
    %v369 = vpack.c.bf16 %v161, %v157
    %v370 = vpack.c.bf16 %v166, %v162
    %v371 = vpack.c.bf16 %v167, %v163
    %v372 = vpack.c.bf16 %v168, %v164
    %v373 = vpack.c.bf16 %v169, %v165
    %v374 = vpack.c.bf16 %v174, %v170
    %v375 = vpack.c.bf16 %v175, %v171
    %v376 = vpack.c.bf16 %v176, %v172
    %v377 = vpack.c.bf16 %v177, %v173
    %v378 = vpack.c.bf16 %v182, %v178
    %v379 = vpack.c.bf16 %v183, %v179
    %v380 = vpack.c.bf16 %v184, %v180
    %v381 = vpack.c.bf16 %v185, %v181
    %v382 = vpack.c.bf16 %v190, %v186
    %v383 = vpack.c.bf16 %v191, %v187
    %v384 = vpack.c.bf16 %v192, %v188
    %v385 = vpack.c.bf16 %v193, %v189
    %v386 = vpack.c.bf16 %v198, %v194
    %v387 = vpack.c.bf16 %v199, %v195
    %v388 = vpack.c.bf16 %v200, %v196
    %v389 = vpack.c.bf16 %v201, %v197
    %v390 = vpack.c.bf16 %v206, %v202
    %v391 = vpack.c.bf16 %v207, %v203
    %v392 = vpack.c.bf16 %v208, %v204
    %v393 = vpack.c.bf16 %v209, %v205
    %v394 = vpack.c.bf16 %v214, %v210
    %v395 = vpack.c.bf16 %v215, %v211
    %v396 = vpack.c.bf16 %v216, %v212
    %v397 = vpack.c.bf16 %v217, %v213
    %v398 = vpack.c.bf16 %v222, %v218
    %v399 = vpack.c.bf16 %v223, %v219
    %v400 = vpack.c.bf16 %v224, %v220
    %v401 = vpack.c.bf16 %v225, %v221
    %v402 = vpack.c.bf16 %v230, %v226
    %v403 = vpack.c.bf16 %v231, %v227
    %v404 = vpack.c.bf16 %v232, %v228
    %v405 = vpack.c.bf16 %v233, %v229
    %v406 = vpack.c.bf16 %v238, %v234
    %v407 = vpack.c.bf16 %v239, %v235
    %v408 = vpack.c.bf16 %v240, %v236
    %v409 = vpack.c.bf16 %v241, %v237
    %v410 = vpack.c.bf16 %v246, %v242
    %v411 = vpack.c.bf16 %v247, %v243
    %v412 = vpack.c.bf16 %v248, %v244
    %v413 = vpack.c.bf16 %v249, %v245
    %v414 = vpack.c.bf16 %v254, %v250
    %v415 = vpack.c.bf16 %v255, %v251
    %v416 = vpack.c.bf16 %v256, %v252
    %v417 = vpack.c.bf16 %v257, %v253
    %v418 = vpack.c.bf16 %v262, %v258
    %v419 = vpack.c.bf16 %v263, %v259
    %v420 = vpack.c.bf16 %v264, %v260
    %v421 = vpack.c.bf16 %v265, %v261
    %v422 = vpack.c.bf16 %v270, %v266
    %v423 = vpack.c.bf16 %v271, %v267
    %v424 = vpack.c.bf16 %v272, %v268
    %v425 = vpack.c.bf16 %v273, %v269
    %v426 = vpack.c.bf16 %v278, %v274
    %v427 = vpack.c.bf16 %v279, %v275
    %v428 = vpack.c.bf16 %v280, %v276
    %v429 = vpack.c.bf16 %v281, %v277
    %v430 = vpack.c.bf16 %v286, %v282
    %v431 = vpack.c.bf16 %v287, %v283
    %v432 = vpack.c.bf16 %v288, %v284
    %v433 = vpack.c.bf16 %v289, %v285
    %v434 = vpack.c.bf16 %v294, %v290
    %v435 = vpack.c.bf16 %v295, %v291
    %v436 = vpack.c.bf16 %v296, %v292
    %v437 = vpack.c.bf16 %v297, %v293
    %v438 = vpack.c.bf16 %v302, %v298
    %v439 = vpack.c.bf16 %v303, %v299
    %v440 = vpack.c.bf16 %v304, %v300
    %v441 = vpack.c.bf16 %v305, %v301
    %v442 = vpack.c.bf16 %v310, %v306
    %v443 = vpack.c.bf16 %v311, %v307
    %v444 = vpack.c.bf16 %v312, %v308
    %v445 = vpack.c.bf16 %v313, %v309
    %v446 = vpack.c.bf16 %v318, %v314
    %v447 = vpack.c.bf16 %v319, %v315
    %v448 = vpack.c.bf16 %v320, %v316
    %v449 = vpack.c.bf16 %v321, %v317
    %v450 = vld [vmem:[#allocation7] sm:$0xf]
    %v452 = vlaneseq
    %v453 = vshrl.u32 %v452, 7
    %v454 = vsub.s32 0, %v453
    %v455 = vrot.slane %v450, %v454
    %v456 = vlaneseq
    %v457 = vshrl.u32 %v456, 7
    %v458 = vsub.s32 1, %v457
    %v459 = vrot.slane %v450, %v458
    %v460 = vlaneseq
    %v461 = vshrl.u32 %v460, 7
    %v462 = vsub.s32 2, %v461
    %v463 = vrot.slane %v450, %v462
    %v464 = vlaneseq
    %v465 = vshrl.u32 %v464, 7
    %v466 = vsub.s32 3, %v465
    %v467 = vrot.slane %v450, %v466
    %472 = vmatprep.subr.bf16.mxu0 %v351
    %473 = vmatpush1.bf16.msra.mxu0 %v350
    %474 = vmatprep.subr.bf16.mxu0 %v347
    %475 = vmatpush1.bf16.msra.mxu0 %v346
    %476 = vmatprep.subr.bf16.mxu0 %v343
    %477 = vmatpush1.bf16.msra.mxu0 %v342
    %478 = vmatprep.subr.bf16.mxu0 %v339
    %479 = vmatpush1.bf16.msra.mxu0 %v338
    %480 = vmatprep.subr.bf16.mxu0 %v335
    %481 = vmatpush1.bf16.msra.mxu0 %v334
    %482 = vmatprep.subr.bf16.mxu0 %v331
    %483 = vmatpush1.bf16.msra.mxu0 %v330
    %484 = vmatprep.subr.bf16.mxu0 %v327
    %485 = vmatpush1.bf16.msra.mxu0 %v326
    %486 = vmatprep.subr.bf16.mxu0 %v323
    %487 = vmatpush1.bf16.msra.mxu0 %v322
    %488 = vmatprep.subr.bf16.mxu0 %v383
    %489 = vmatpush2.bf16.msra.mxu0 %v382
    %490 = vmatprep.subr.bf16.mxu0 %v379
    %491 = vmatpush2.bf16.msra.mxu0 %v378
    %492 = vmatprep.subr.bf16.mxu0 %v375
    %493 = vmatpush2.bf16.msra.mxu0 %v374
    %494 = vmatprep.subr.bf16.mxu0 %v371
    %495 = vmatpush2.bf16.msra.mxu0 %v370
    %496 = vmatprep.subr.bf16.mxu0 %v367
    %497 = vmatpush2.bf16.msra.mxu0 %v366
    %498 = vmatprep.subr.bf16.mxu0 %v363
    %499 = vmatpush2.bf16.msra.mxu0 %v362
    %500 = vmatprep.subr.bf16.mxu0 %v359
    %501 = vmatpush2.bf16.msra.mxu0 %v358
    %502 = vmatprep.subr.bf16.mxu0 %v355
    %503 = vmatpush2.bf16.msra.mxu0 %v354
    %504 = vmatprep.mubr.bf16.mxu0 %v63
    %505 = vmatmul.mubr.bf16.gmra.mxu0 %v62
    %v506 = vpop.f32.mrf.mxu0
    %v507 = vadd.f32 %v455, %v506
    %v508 = vpop.f32.mrf.mxu0
    %v509 = vadd.f32 %v459, %v508
    %v510 = vpop.f32.mrf.mxu0
    %v511 = vadd.f32 %v455, %v510
    %v512 = vpop.f32.mrf.mxu0
    %v513 = vadd.f32 %v459, %v512
    %514 = vdwg.mxu0
    %515 = vmatprep.subr.bf16.mxu0 %v415
    %516 = vmatpush1.bf16.msra.mxu0 %v414
    %517 = vmatprep.subr.bf16.mxu0 %v411
    %518 = vmatpush1.bf16.msra.mxu0 %v410
    %519 = vmatprep.subr.bf16.mxu0 %v407
    %520 = vmatpush1.bf16.msra.mxu0 %v406
    %521 = vmatprep.subr.bf16.mxu0 %v403
    %522 = vmatpush1.bf16.msra.mxu0 %v402
    %523 = vmatprep.subr.bf16.mxu0 %v399
    %524 = vmatpush1.bf16.msra.mxu0 %v398
    %525 = vmatprep.subr.bf16.mxu0 %v395
    %526 = vmatpush1.bf16.msra.mxu0 %v394
    %527 = vmatprep.subr.bf16.mxu0 %v391
    %528 = vmatpush1.bf16.msra.mxu0 %v390
    %529 = vmatprep.subr.bf16.mxu0 %v387
    %530 = vmatpush1.bf16.msra.mxu0 %v386
    %531 = vmatprep.subr.bf16.mxu0 %v447
    %532 = vmatpush2.bf16.msra.mxu0 %v446
    %533 = vmatprep.subr.bf16.mxu0 %v443
    %534 = vmatpush2.bf16.msra.mxu0 %v442
    %535 = vmatprep.subr.bf16.mxu0 %v439
    %536 = vmatpush2.bf16.msra.mxu0 %v438
    %537 = vmatprep.subr.bf16.mxu0 %v435
    %538 = vmatpush2.bf16.msra.mxu0 %v434
    %539 = vmatprep.subr.bf16.mxu0 %v431
    %540 = vmatpush2.bf16.msra.mxu0 %v430
    %541 = vmatprep.subr.bf16.mxu0 %v427
    %542 = vmatpush2.bf16.msra.mxu0 %v426
    %543 = vmatprep.subr.bf16.mxu0 %v423
    %544 = vmatpush2.bf16.msra.mxu0 %v422
    %545 = vmatprep.subr.bf16.mxu0 %v419
    %546 = vmatpush2.bf16.msra.mxu0 %v418
    %547 = vmatprep.mubr.bf16.mxu0 %v65
    %548 = vmatmul.mubr.bf16.gmra.mxu0 %v64
    %v549 = vpop.f32.mrf.mxu0
    %v550 = vadd.f32 %v507, %v549
    %v551 = vpop.f32.mrf.mxu0
    %v552 = vadd.f32 %v509, %v551
    %v553 = vpop.f32.mrf.mxu0
    %v554 = vadd.f32 %v511, %v553
    %v555 = vpop.f32.mrf.mxu0
    %v556 = vadd.f32 %v513, %v555
    %557 = vdwg.mxu0
    %558 = vmatprep.subr.bf16.mxu0 %v353
    %559 = vmatpush1.bf16.msra.mxu0 %v352
    %560 = vmatprep.subr.bf16.mxu0 %v349
    %561 = vmatpush1.bf16.msra.mxu0 %v348
    %562 = vmatprep.subr.bf16.mxu0 %v345
    %563 = vmatpush1.bf16.msra.mxu0 %v344
    %564 = vmatprep.subr.bf16.mxu0 %v341
    %565 = vmatpush1.bf16.msra.mxu0 %v340
    %566 = vmatprep.subr.bf16.mxu0 %v337
    %567 = vmatpush1.bf16.msra.mxu0 %v336
    %568 = vmatprep.subr.bf16.mxu0 %v333
    %569 = vmatpush1.bf16.msra.mxu0 %v332
    %570 = vmatprep.subr.bf16.mxu0 %v329
    %571 = vmatpush1.bf16.msra.mxu0 %v328
    %572 = vmatprep.subr.bf16.mxu0 %v325
    %573 = vmatpush1.bf16.msra.mxu0 %v324
    %574 = vmatprep.subr.bf16.mxu0 %v385
    %575 = vmatpush2.bf16.msra.mxu0 %v384
    %576 = vmatprep.subr.bf16.mxu0 %v381
    %577 = vmatpush2.bf16.msra.mxu0 %v380
    %578 = vmatprep.subr.bf16.mxu0 %v377
    %579 = vmatpush2.bf16.msra.mxu0 %v376
    %580 = vmatprep.subr.bf16.mxu0 %v373
    %581 = vmatpush2.bf16.msra.mxu0 %v372
    %582 = vmatprep.subr.bf16.mxu0 %v369
    %583 = vmatpush2.bf16.msra.mxu0 %v368
    %584 = vmatprep.subr.bf16.mxu0 %v365
    %585 = vmatpush2.bf16.msra.mxu0 %v364
    %586 = vmatprep.subr.bf16.mxu0 %v361
    %587 = vmatpush2.bf16.msra.mxu0 %v360
    %588 = vmatprep.subr.bf16.mxu0 %v357
    %589 = vmatpush2.bf16.msra.mxu0 %v356
    %590 = vmatprep.mubr.bf16.mxu0 %v63
    %591 = vmatmul.mubr.bf16.gmra.mxu0 %v62
    %v592 = vpop.f32.mrf.mxu0
    %v593 = vadd.f32 %v463, %v592
    %v594 = vpop.f32.mrf.mxu0
    %v595 = vadd.f32 %v467, %v594
    %v596 = vpop.f32.mrf.mxu0
    %v597 = vadd.f32 %v463, %v596
    %v598 = vpop.f32.mrf.mxu0
    %v599 = vadd.f32 %v467, %v598
    %600 = vdwg.mxu0
    %601 = vmatprep.subr.bf16.mxu0 %v417
    %602 = vmatpush1.bf16.msra.mxu0 %v416
    %603 = vmatprep.subr.bf16.mxu0 %v413
    %604 = vmatpush1.bf16.msra.mxu0 %v412
    %605 = vmatprep.subr.bf16.mxu0 %v409
    %606 = vmatpush1.bf16.msra.mxu0 %v408
    %607 = vmatprep.subr.bf16.mxu0 %v405
    %608 = vmatpush1.bf16.msra.mxu0 %v404
    %609 = vmatprep.subr.bf16.mxu0 %v401
    %610 = vmatpush1.bf16.msra.mxu0 %v400
    %611 = vmatprep.subr.bf16.mxu0 %v397
    %612 = vmatpush1.bf16.msra.mxu0 %v396
    %613 = vmatprep.subr.bf16.mxu0 %v393
    %614 = vmatpush1.bf16.msra.mxu0 %v392
    %615 = vmatprep.subr.bf16.mxu0 %v389
    %616 = vmatpush1.bf16.msra.mxu0 %v388
    %617 = vmatprep.subr.bf16.mxu0 %v449
    %618 = vmatpush2.bf16.msra.mxu0 %v448
    %619 = vmatprep.subr.bf16.mxu0 %v445
    %620 = vmatpush2.bf16.msra.mxu0 %v444
    %621 = vmatprep.subr.bf16.mxu0 %v441
    %622 = vmatpush2.bf16.msra.mxu0 %v440
    %623 = vmatprep.subr.bf16.mxu0 %v437
    %624 = vmatpush2.bf16.msra.mxu0 %v436
    %625 = vmatprep.subr.bf16.mxu0 %v433
    %626 = vmatpush2.bf16.msra.mxu0 %v432
    %627 = vmatprep.subr.bf16.mxu0 %v429
    %628 = vmatpush2.bf16.msra.mxu0 %v428
    %629 = vmatprep.subr.bf16.mxu0 %v425
    %630 = vmatpush2.bf16.msra.mxu0 %v424
    %631 = vmatprep.subr.bf16.mxu0 %v421
    %632 = vmatpush2.bf16.msra.mxu0 %v420
    %633 = vmatprep.mubr.bf16.mxu0 %v65
    %634 = vmatmul.mubr.bf16.gmra.mxu0 %v64
    %v635 = vpop.f32.mrf.mxu0
    %v636 = vadd.f32 %v593, %v635
    %v637 = vpop.f32.mrf.mxu0
    %v638 = vadd.f32 %v595, %v637
    %v639 = vpop.f32.mrf.mxu0
    %v640 = vadd.f32 %v597, %v639
    %v641 = vpop.f32.mrf.mxu0
    %v642 = vadd.f32 %v599, %v641
    %643 = vdwg.mxu0
    %v644 = vmax.f32 %v550, 0.0
    %v645 = vmax.f32 %v552, 0.0
    %v646 = vmax.f32 %v636, 0.0
    %v647 = vmax.f32 %v638, 0.0
    %v648 = vmax.f32 %v554, 0.0
    %v649 = vmax.f32 %v556, 0.0
    %v650 = vmax.f32 %v640, 0.0
    %v651 = vmax.f32 %v642, 0.0
    %652 = vst [vmem:[#allocation8] sm:$0xff] %v644
    %653 = vst [vmem:[#allocation8 + $0x8] sm:$0xff] %v645
    %654 = vst [vmem:[#allocation8 + $0x10] sm:$0xff] %v646
    %655 = vst [vmem:[#allocation8 + $0x18] sm:$0xff] %v647
    %656 = vst [vmem:[#allocation8 + $0x20] sm:$0xff] %v648
    %657 = vst [vmem:[#allocation8 + $0x28] sm:$0xff] %v649
    %658 = vst [vmem:[#allocation8 + $0x30] sm:$0xff] %v650
    %659 = vst [vmem:[#allocation8 + $0x38] sm:$0xff] %v651
    // Predicated region
    $region26: #{tpu_custom_call.1} parent=1 // pred_check
      _
    $region27: #{tpu_custom_call.1} parent=1 // pred_check_branch
      %661 = sbr.rel (0) target = $region29
    $region28: #{tpu_custom_call.1} parent=1 // pred_region
      %s663 = ssub.s32 1024, 1024
      %664 = vsyncadd [#allocation4], %s663
      %s665 = sshll.u32 [#allocation8], 4
      %s666 = int_to_ptr.vmem [resolvable:$true] %s665
      %671 = dma.vmem_to_hbm [thread:$0]  %s666, 1024, %s3, [#allocation4], 512, 512, 32
    $region29: #{tpu_custom_call.1} parent=1 // pred_fallthru
      _
    // Predicated region
    $region30: #{tpu_custom_call.1} parent=1 // pred_check
      _
    $region31: #{tpu_custom_call.1} parent=1 // pred_check_branch
      %673 = sbr.rel (0) target = $region33
    $region32: #{tpu_custom_call.1} parent=1 // pred_region
      %674 = dma.done [#allocation4], 1024
    $region33: #{tpu_custom_call.1} parent=1 // pred_fallthru
      _
    %675 = vsyncpa [#allocation3], 1
    %676 = vsyncpa [#allocation6], 1
    %677 = vsyncpa [#allocation4], 1

// kernel: tpu_custom_call.1
$region0: #{tpu_custom_call.1}
  #allocation0 [shape = 'u32[]', space=smem, size = 0x4, offset = 0x4, fixed_abs, tag = 'smem constant byte address 0x4 - core index']
  #allocation1 [shape = 'u32[144,128]{1,0:T(1,128)}', space=vmem, size = 0x12000, scoped, tag = 'internal scratch']
  %s0 = inlined_call_operand.hbm [shape: f32[16,512], index: 0, kind: input, shape index: {}]
  %s1 = inlined_call_operand.hbm [shape: f32[512,512], index: 1, kind: input, shape index: {}]
  %s2 = inlined_call_operand.hbm [shape: f32[1,512], index: 2, kind: input, shape index: {}]
  %s3 = inlined_call_operand.hbm [shape: f32[16,512], index: 3, kind: output, shape index: {}]
  %s4 = sld [smem:[#allocation0]]
  $region34: #{tpu_custom_call.1} parent=0
    _
  %s6 = ssub.s32 1, %s4
  %s7 = scalar_select 0, %s6, %s4
  $region1: #{tpu_custom_call.1} parent=0
    #allocation2 [shape = 'u8[32768]{0}', space=vmem, size = 0x8000, scoped, tag = 'input window, operand 0, single buffered']
    #allocation3 [shape = 's32[1]{0}', space=sflag, size = 0x4, scoped, tag = 'scoped memory for tpu_custom_call.1']
    #allocation4 [shape = 's32[1]{0}', space=sflag, size = 0x4, scoped, tag = 'scoped memory for tpu_custom_call.1']
    #allocation5 [shape = 'u8[1048576]{0}', space=vmem, size = 0x100000, scoped, tag = 'input window, operand 1, single buffered']
    #allocation6 [shape = 's32[1]{0}', space=sflag, size = 0x4, scoped, tag = 'scoped memory for tpu_custom_call.1']
    #allocation7 [shape = 'u8[2048]{0}', space=vmem, size = 0x800, scoped, tag = 'input window, operand 2, single buffered']
    #allocation8 [shape = 'u8[32768]{0}', space=vmem, size = 0x8000, scoped, tag = 'output window, operand 0, single buffered']
    %8 = vsyncpa [#allocation3], 0
    %9 = vsyncpa [#allocation6], 0
    %10 = vsyncpa [#allocation4], 0
    // Predicated region
    $region2: #{tpu_custom_call.1} parent=1 // pred_check
      _
    $region3: #{tpu_custom_call.1} parent=1 // pred_check_branch
      %12 = sbr.rel (0) target = $region5
    $region4: #{tpu_custom_call.1} parent=1 // pred_region
      %s14 = ssub.s32 1024, 1024
      %15 = vsyncadd [#allocation3], %s14
      %s16 = sshll.u32 [#allocation2], 4
      %s17 = int_to_ptr.vmem [resolvable:$true] %s16
      %22 = dma.hbm_to_vmem [thread:$0]  %s0, 1024, %s17, [#allocation3], 512, 512, 32
    $region5: #{tpu_custom_call.1} parent=1 // pred_fallthru
      _
    // Predicated region
    $region6: #{tpu_custom_call.1} parent=1 // pred_check
      _
    $region7: #{tpu_custom_call.1} parent=1 // pred_check_branch
      %24 = sbr.rel (0) target = $region9
    $region8: #{tpu_custom_call.1} parent=1 // pred_region
      %s26 = ssub.s32 32768, 32768
      %27 = vsyncadd [#allocation6], %s26
      %s28 = sshll.u32 [#allocation5], 4
      %s29 = int_to_ptr.vmem [resolvable:$true] %s28
      %34 = dma.hbm_to_vmem [thread:$0]  %s1, 32768, %s29, [#allocation6], 512, 512, 32
    $region9: #{tpu_custom_call.1} parent=1 // pred_fallthru
      _
    // Predicated region
    $region10: #{tpu_custom_call.1} parent=1 // pred_check
      _
    $region11: #{tpu_custom_call.1} parent=1 // pred_check_branch
      %36 = sbr.rel (0) target = $region13
    $region12: #{tpu_custom_call.1} parent=1 // pred_region
      %s38 = ssub.s32 64, 64
      %39 = vsyncadd [#allocation6], %s38
      %s41 = sshll.u32 [#allocation7], 4
      %s42 = int_to_ptr.vmem [resolvable:$true] %s41
      %44 = dma.hbm_to_vmem [thread:$0]  %s2, 64, %s42, [#allocation6]
    $region13: #{tpu_custom_call.1} parent=1 // pred_fallthru
      _
    // Predicated region
    $region14: #{tpu_custom_call.1} parent=1 // pred_check
      _
    $region15: #{tpu_custom_call.1} parent=1 // pred_check_branch
      %46 = sbr.rel (0) target = $region17
    $region16: #{tpu_custom_call.1} parent=1 // pred_region
      %47 = dma.done [#allocation3], 1024
    $region17: #{tpu_custom_call.1} parent=1 // pred_fallthru
      _
    // Predicated region
    $region18: #{tpu_custom_call.1} parent=1 // pred_check
      _
    $region19: #{tpu_custom_call.1} parent=1 // pred_check_branch
      %49 = sbr.rel (0) target = $region21
    $region20: #{tpu_custom_call.1} parent=1 // pred_region
      %50 = dma.done [#allocation6], 32768
    $region21: #{tpu_custom_call.1} parent=1 // pred_fallthru
      _
    // Predicated region
    $region22: #{tpu_custom_call.1} parent=1 // pred_check
      _
    $region23: #{tpu_custom_call.1} parent=1 // pred_check_branch
      %52 = sbr.rel (0) target = $region25
    $region24: #{tpu_custom_call.1} parent=1 // pred_region
      %53 = dma.done [#allocation6], 64
    $region25: #{tpu_custom_call.1} parent=1 // pred_fallthru
      _
    %v54 = vld [vmem:[#allocation2] sm:$0xff]
    %v55 = vld [vmem:[#allocation2 + $0x8] sm:$0xff]
    %v56 = vld [vmem:[#allocation2 + $0x10] sm:$0xff]
    %v57 = vld [vmem:[#allocation2 + $0x18] sm:$0xff]
    %v58 = vld [vmem:[#allocation2 + $0x20] sm:$0xff]
    %v59 = vld [vmem:[#allocation2 + $0x28] sm:$0xff]
    %v60 = vld [vmem:[#allocation2 + $0x30] sm:$0xff]
    %v61 = vld [vmem:[#allocation2 + $0x38] sm:$0xff]
    %v62 = vpack.c.bf16 %v58, %v54
    %v63 = vpack.c.bf16 %v59, %v55
    %v64 = vpack.c.bf16 %v60, %v56
    %v65 = vpack.c.bf16 %v61, %v57
    %v66 = vld [vmem:[#allocation5] sm:$0xff]
    %v67 = vld [vmem:[#allocation5 + $0x8] sm:$0xff]
    %v68 = vld [vmem:[#allocation5 + $0x10] sm:$0xff]
    %v69 = vld [vmem:[#allocation5 + $0x18] sm:$0xff]
    %v70 = vld [vmem:[#allocation5 + $0x20] sm:$0xff]
    %v71 = vld [vmem:[#allocation5 + $0x28] sm:$0xff]
    %v72 = vld [vmem:[#allocation5 + $0x30] sm:$0xff]
    %v73 = vld [vmem:[#allocation5 + $0x38] sm:$0xff]
    %v74 = vld [vmem:[#allocation5 + $0x40] sm:$0xff]
    %v75 = vld [vmem:[#allocation5 + $0x48] sm:$0xff]
    %v76 = vld [vmem:[#allocation5 + $0x50] sm:$0xff]
    %v77 = vld [vmem:[#allocation5 + $0x58] sm:$0xff]
    %v78 = vld [vmem:[#allocation5 + $0x60] sm:$0xff]
    %v79 = vld [vmem:[#allocation5 + $0x68] sm:$0xff]
    %v80 = vld [vmem:[#allocation5 + $0x70] sm:$0xff]
    %v81 = vld [vmem:[#allocation5 + $0x78] sm:$0xff]
    %v82 = vld [vmem:[#allocation5 + $0x80] sm:$0xff]
    %v83 = vld [vmem:[#allocation5 + $0x88] sm:$0xff]
    %v84 = vld [vmem:[#allocation5 + $0x90] sm:$0xff]
    %v85 = vld [vmem:[#allocation5 + $0x98] sm:$0xff]
    %v86 = vld [vmem:[#allocation5 + $0xa0] sm:$0xff]
    %v87 = vld [vmem:[#allocation5 + $0xa8] sm:$0xff]
    %v88 = vld [vmem:[#allocation5 + $0xb0] sm:$0xff]
    %v89 = vld [vmem:[#allocation5 + $0xb8] sm:$0xff]
    %v90 = vld [vmem:[#allocation5 + $0xc0] sm:$0xff]
    %v91 = vld [vmem:[#allocation5 + $0xc8] sm:$0xff]
    %v92 = vld [vmem:[#allocation5 + $0xd0] sm:$0xff]
    %v93 = vld [vmem:[#allocation5 + $0xd8] sm:$0xff]
    %v94 = vld [vmem:[#allocation5 + $0xe0] sm:$0xff]
    %v95 = vld [vmem:[#allocation5 + $0xe8] sm:$0xff]
    %v96 = vld [vmem:[#allocation5 + $0xf0] sm:$0xff]
    %v97 = vld [vmem:[#allocation5 + $0xf8] sm:$0xff]
    %v98 = vld [vmem:[#allocation5 + $0x100] sm:$0xff]
    %v99 = vld [vmem:[#allocation5 + $0x108] sm:$0xff]
    %v100 = vld [vmem:[#allocation5 + $0x110] sm:$0xff]
    %v101 = vld [vmem:[#allocation5 + $0x118] sm:$0xff]
    %v102 = vld [vmem:[#allocation5 + $0x120] sm:$0xff]
    %v103 = vld [vmem:[#allocation5 + $0x128] sm:$0xff]
    %v104 = vld [vmem:[#allocation5 + $0x130] sm:$0xff]
    %v105 = vld [vmem:[#allocation5 + $0x138] sm:$0xff]
    %v106 = vld [vmem:[#allocation5 + $0x140] sm:$0xff]
    %v107 = vld [vmem:[#allocation5 + $0x148] sm:$0xff]
    %v108 = vld [vmem:[#allocation5 + $0x150] sm:$0xff]
    %v109 = vld [vmem:[#allocation5 + $0x158] sm:$0xff]
    %v110 = vld [vmem:[#allocation5 + $0x160] sm:$0xff]
    %v111 = vld [vmem:[#allocation5 + $0x168] sm:$0xff]
    %v112 = vld [vmem:[#allocation5 + $0x170] sm:$0xff]
    %v113 = vld [vmem:[#allocation5 + $0x178] sm:$0xff]
    %v114 = vld [vmem:[#allocation5 + $0x180] sm:$0xff]
    %v115 = vld [vmem:[#allocation5 + $0x188] sm:$0xff]
    %v116 = vld [vmem:[#allocation5 + $0x190] sm:$0xff]
    %v117 = vld [vmem:[#allocation5 + $0x198] sm:$0xff]
    %v118 = vld [vmem:[#allocation5 + $0x1a0] sm:$0xff]
    %v119 = vld [vmem:[#allocation5 + $0x1a8] sm:$0xff]
    %v120 = vld [vmem:[#allocation5 + $0x1b0] sm:$0xff]
    %v121 = vld [vmem:[#allocation5 + $0x1b8] sm:$0xff]
    %v122 = vld [vmem:[#allocation5 + $0x1c0] sm:$0xff]
    %v123 = vld [vmem:[#allocation5 + $0x1c8] sm:$0xff]
    %v124 = vld [vmem:[#allocation5 + $0x1d0] sm:$0xff]
    %v125 = vld [vmem:[#allocation5 + $0x1d8] sm:$0xff]
    %v126 = vld [vmem:[#allocation5 + $0x1e0] sm:$0xff]
    %v127 = vld [vmem:[#allocation5 + $0x1e8] sm:$0xff]
    %v128 = vld [vmem:[#allocation5 + $0x1f0] sm:$0xff]
    %v129 = vld [vmem:[#allocation5 + $0x1f8] sm:$0xff]
    %v130 = vld [vmem:[#allocation5 + $0x200] sm:$0xff]
    %v131 = vld [vmem:[#allocation5 + $0x208] sm:$0xff]
    %v132 = vld [vmem:[#allocation5 + $0x210] sm:$0xff]
    %v133 = vld [vmem:[#allocation5 + $0x218] sm:$0xff]
    %v134 = vld [vmem:[#allocation5 + $0x220] sm:$0xff]
    %v135 = vld [vmem:[#allocation5 + $0x228] sm:$0xff]
    %v136 = vld [vmem:[#allocation5 + $0x230] sm:$0xff]
    %v137 = vld [vmem:[#allocation5 + $0x238] sm:$0xff]
    %v138 = vld [vmem:[#allocation5 + $0x240] sm:$0xff]
    %v139 = vld [vmem:[#allocation5 + $0x248] sm:$0xff]
    %v140 = vld [vmem:[#allocation5 + $0x250] sm:$0xff]
    %v141 = vld [vmem:[#allocation5 + $0x258] sm:$0xff]
    %v142 = vld [vmem:[#allocation5 + $0x260] sm:$0xff]
    %v143 = vld [vmem:[#allocation5 + $0x268] sm:$0xff]
    %v144 = vld [vmem:[#allocation5 + $0x270] sm:$0xff]
    %v145 = vld [vmem:[#allocation5 + $0x278] sm:$0xff]
    %v146 = vld [vmem:[#allocation5 + $0x280] sm:$0xff]
    %v147 = vld [vmem:[#allocation5 + $0x288] sm:$0xff]
    %v148 = vld [vmem:[#allocation5 + $0x290] sm:$0xff]
    %v149 = vld [vmem:[#allocation5 + $0x298] sm:$0xff]
    %v150 = vld [vmem:[#allocation5 + $0x2a0] sm:$0xff]
    %v151 = vld [vmem:[#allocation5 + $0x2a8] sm:$0xff]
    %v152 = vld [vmem:[#allocation5 + $0x2b0] sm:$0xff]
    %v153 = vld [vmem:[#allocation5 + $0x2b8] sm:$0xff]
    %v154 = vld [vmem:[#allocation5 + $0x2c0] sm:$0xff]
    %v155 = vld [vmem:[#allocation5 + $0x2c8] sm:$0xff]
    %v156 = vld [vmem:[#allocation5 + $0x2d0] sm:$0xff]
    %v157 = vld [vmem:[#allocation5 + $0x2d8] sm:$0xff]
    %v158 = vld [vmem:[#allocation5 + $0x2e0] sm:$0xff]
    %v159 = vld [vmem:[#allocation5 + $0x2e8] sm:$0xff]
    %v160 = vld [vmem:[#allocation5 + $0x2f0] sm:$0xff]
    %v161 = vld [vmem:[#allocation5 + $0x2f8] sm:$0xff]
    %v162 = vld [vmem:[#allocation5 + $0x300] sm:$0xff]
    %v163 = vld [vmem:[#allocation5 + $0x308] sm:$0xff]
    %v164 = vld [vmem:[#allocation5 + $0x310] sm:$0xff]
    %v165 = vld [vmem:[#allocation5 + $0x318] sm:$0xff]
    %v166 = vld [vmem:[#allocation5 + $0x320] sm:$0xff]
    %v167 = vld [vmem:[#allocation5 + $0x328] sm:$0xff]
    %v168 = vld [vmem:[#allocation5 + $0x330] sm:$0xff]
    %v169 = vld [vmem:[#allocation5 + $0x338] sm:$0xff]
    %v170 = vld [vmem:[#allocation5 + $0x340] sm:$0xff]
    %v171 = vld [vmem:[#allocation5 + $0x348] sm:$0xff]
    %v172 = vld [vmem:[#allocation5 + $0x350] sm:$0xff]
    %v173 = vld [vmem:[#allocation5 + $0x358] sm:$0xff]
    %v174 = vld [vmem:[#allocation5 + $0x360] sm:$0xff]
    %v175 = vld [vmem:[#allocation5 + $0x368] sm:$0xff]
    %v176 = vld [vmem:[#allocation5 + $0x370] sm:$0xff]
    %v177 = vld [vmem:[#allocation5 + $0x378] sm:$0xff]
    %v178 = vld [vmem:[#allocation5 + $0x380] sm:$0xff]
    %v179 = vld [vmem:[#allocation5 + $0x388] sm:$0xff]
    %v180 = vld [vmem:[#allocation5 + $0x390] sm:$0xff]
    %v181 = vld [vmem:[#allocation5 + $0x398] sm:$0xff]
    %v182 = vld [vmem:[#allocation5 + $0x3a0] sm:$0xff]
    %v183 = vld [vmem:[#allocation5 + $0x3a8] sm:$0xff]
    %v184 = vld [vmem:[#allocation5 + $0x3b0] sm:$0xff]
    %v185 = vld [vmem:[#allocation5 + $0x3b8] sm:$0xff]
    %v186 = vld [vmem:[#allocation5 + $0x3c0] sm:$0xff]
    %v187 = vld [vmem:[#allocation5 + $0x3c8] sm:$0xff]
    %v188 = vld [vmem:[#allocation5 + $0x3d0] sm:$0xff]
    %v189 = vld [vmem:[#allocation5 + $0x3d8] sm:$0xff]
    %v190 = vld [vmem:[#allocation5 + $0x3e0] sm:$0xff]
    %v191 = vld [vmem:[#allocation5 + $0x3e8] sm:$0xff]
    %v192 = vld [vmem:[#allocation5 + $0x3f0] sm:$0xff]
    %v193 = vld [vmem:[#allocation5 + $0x3f8] sm:$0xff]
    %v194 = vld [vmem:[#allocation5 + $0x400] sm:$0xff]
    %v195 = vld [vmem:[#allocation5 + $0x408] sm:$0xff]
    %v196 = vld [vmem:[#allocation5 + $0x410] sm:$0xff]
    %v197 = vld [vmem:[#allocation5 + $0x418] sm:$0xff]
    %v198 = vld [vmem:[#allocation5 + $0x420] sm:$0xff]
    %v199 = vld [vmem:[#allocation5 + $0x428] sm:$0xff]
    %v200 = vld [vmem:[#allocation5 + $0x430] sm:$0xff]
    %v201 = vld [vmem:[#allocation5 + $0x438] sm:$0xff]
    %v202 = vld [vmem:[#allocation5 + $0x440] sm:$0xff]
    %v203 = vld [vmem:[#allocation5 + $0x448] sm:$0xff]
    %v204 = vld [vmem:[#allocation5 + $0x450] sm:$0xff]
    %v205 = vld [vmem:[#allocation5 + $0x458] sm:$0xff]
    %v206 = vld [vmem:[#allocation5 + $0x460] sm:$0xff]
    %v207 = vld [vmem:[#allocation5 + $0x468] sm:$0xff]
    %v208 = vld [vmem:[#allocation5 + $0x470] sm:$0xff]
    %v209 = vld [vmem:[#allocation5 + $0x478] sm:$0xff]
    %v210 = vld [vmem:[#allocation5 + $0x480] sm:$0xff]
    %v211 = vld [vmem:[#allocation5 + $0x488] sm:$0xff]
    %v212 = vld [vmem:[#allocation5 + $0x490] sm:$0xff]
    %v213 = vld [vmem:[#allocation5 + $0x498] sm:$0xff]
    %v214 = vld [vmem:[#allocation5 + $0x4a0] sm:$0xff]
    %v215 = vld [vmem:[#allocation5 + $0x4a8] sm:$0xff]
    %v216 = vld [vmem:[#allocation5 + $0x4b0] sm:$0xff]
    %v217 = vld [vmem:[#allocation5 + $0x4b8] sm:$0xff]
    %v218 = vld [vmem:[#allocation5 + $0x4c0] sm:$0xff]
    %v219 = vld [vmem:[#allocation5 + $0x4c8] sm:$0xff]
    %v220 = vld [vmem:[#allocation5 + $0x4d0] sm:$0xff]
    %v221 = vld [vmem:[#allocation5 + $0x4d8] sm:$0xff]
    %v222 = vld [vmem:[#allocation5 + $0x4e0] sm:$0xff]
    %v223 = vld [vmem:[#allocation5 + $0x4e8] sm:$0xff]
    %v224 = vld [vmem:[#allocation5 + $0x4f0] sm:$0xff]
    %v225 = vld [vmem:[#allocation5 + $0x4f8] sm:$0xff]
    %v226 = vld [vmem:[#allocation5 + $0x500] sm:$0xff]
    %v227 = vld [vmem:[#allocation5 + $0x508] sm:$0xff]
    %v228 = vld [vmem:[#allocation5 + $0x510] sm:$0xff]
    %v229 = vld [vmem:[#allocation5 + $0x518] sm:$0xff]
    %v230 = vld [vmem:[#allocation5 + $0x520] sm:$0xff]
    %v231 = vld [vmem:[#allocation5 + $0x528] sm:$0xff]
    %v232 = vld [vmem:[#allocation5 + $0x530] sm:$0xff]
    %v233 = vld [vmem:[#allocation5 + $0x538] sm:$0xff]
    %v234 = vld [vmem:[#allocation5 + $0x540] sm:$0xff]
    %v235 = vld [vmem:[#allocation5 + $0x548] sm:$0xff]
    %v236 = vld [vmem:[#allocation5 + $0x550] sm:$0xff]
    %v237 = vld [vmem:[#allocation5 + $0x558] sm:$0xff]
    %v238 = vld [vmem:[#allocation5 + $0x560] sm:$0xff]
    %v239 = vld [vmem:[#allocation5 + $0x568] sm:$0xff]
    %v240 = vld [vmem:[#allocation5 + $0x570] sm:$0xff]
    %v241 = vld [vmem:[#allocation5 + $0x578] sm:$0xff]
    %v242 = vld [vmem:[#allocation5 + $0x580] sm:$0xff]
    %v243 = vld [vmem:[#allocation5 + $0x588] sm:$0xff]
    %v244 = vld [vmem:[#allocation5 + $0x590] sm:$0xff]
    %v245 = vld [vmem:[#allocation5 + $0x598] sm:$0xff]
    %v246 = vld [vmem:[#allocation5 + $0x5a0] sm:$0xff]
    %v247 = vld [vmem:[#allocation5 + $0x5a8] sm:$0xff]
    %v248 = vld [vmem:[#allocation5 + $0x5b0] sm:$0xff]
    %v249 = vld [vmem:[#allocation5 + $0x5b8] sm:$0xff]
    %v250 = vld [vmem:[#allocation5 + $0x5c0] sm:$0xff]
    %v251 = vld [vmem:[#allocation5 + $0x5c8] sm:$0xff]
    %v252 = vld [vmem:[#allocation5 + $0x5d0] sm:$0xff]
    %v253 = vld [vmem:[#allocation5 + $0x5d8] sm:$0xff]
    %v254 = vld [vmem:[#allocation5 + $0x5e0] sm:$0xff]
    %v255 = vld [vmem:[#allocation5 + $0x5e8] sm:$0xff]
    %v256 = vld [vmem:[#allocation5 + $0x5f0] sm:$0xff]
    %v257 = vld [vmem:[#allocation5 + $0x5f8] sm:$0xff]
    %v258 = vld [vmem:[#allocation5 + $0x600] sm:$0xff]
    %v259 = vld [vmem:[#allocation5 + $0x608] sm:$0xff]
    %v260 = vld [vmem:[#allocation5 + $0x610] sm:$0xff]
    %v261 = vld [vmem:[#allocation5 + $0x618] sm:$0xff]
    %v262 = vld [vmem:[#allocation5 + $0x620] sm:$0xff]
    %v263 = vld [vmem:[#allocation5 + $0x628] sm:$0xff]
    %v264 = vld [vmem:[#allocation5 + $0x630] sm:$0xff]
    %v265 = vld [vmem:[#allocation5 + $0x638] sm:$0xff]
    %v266 = vld [vmem:[#allocation5 + $0x640] sm:$0xff]
    %v267 = vld [vmem:[#allocation5 + $0x648] sm:$0xff]
    %v268 = vld [vmem:[#allocation5 + $0x650] sm:$0xff]
    %v269 = vld [vmem:[#allocation5 + $0x658] sm:$0xff]
    %v270 = vld [vmem:[#allocation5 + $0x660] sm:$0xff]
    %v271 = vld [vmem:[#allocation5 + $0x668] sm:$0xff]
    %v272 = vld [vmem:[#allocation5 + $0x670] sm:$0xff]
    %v273 = vld [vmem:[#allocation5 + $0x678] sm:$0xff]
    %v274 = vld [vmem:[#allocation5 + $0x680] sm:$0xff]
    %v275 = vld [vmem:[#allocation5 + $0x688] sm:$0xff]
    %v276 = vld [vmem:[#allocation5 + $0x690] sm:$0xff]
    %v277 = vld [vmem:[#allocation5 + $0x698] sm:$0xff]
    %v278 = vld [vmem:[#allocation5 + $0x6a0] sm:$0xff]
    %v279 = vld [vmem:[#allocation5 + $0x6a8] sm:$0xff]
    %v280 = vld [vmem:[#allocation5 + $0x6b0] sm:$0xff]
    %v281 = vld [vmem:[#allocation5 + $0x6b8] sm:$0xff]
    %v282 = vld [vmem:[#allocation5 + $0x6c0] sm:$0xff]
    %v283 = vld [vmem:[#allocation5 + $0x6c8] sm:$0xff]
    %v284 = vld [vmem:[#allocation5 + $0x6d0] sm:$0xff]
    %v285 = vld [vmem:[#allocation5 + $0x6d8] sm:$0xff]
    %v286 = vld [vmem:[#allocation5 + $0x6e0] sm:$0xff]
    %v287 = vld [vmem:[#allocation5 + $0x6e8] sm:$0xff]
    %v288 = vld [vmem:[#allocation5 + $0x6f0] sm:$0xff]
    %v289 = vld [vmem:[#allocation5 + $0x6f8] sm:$0xff]
    %v290 = vld [vmem:[#allocation5 + $0x700] sm:$0xff]
    %v291 = vld [vmem:[#allocation5 + $0x708] sm:$0xff]
    %v292 = vld [vmem:[#allocation5 + $0x710] sm:$0xff]
    %v293 = vld [vmem:[#allocation5 + $0x718] sm:$0xff]
    %v294 = vld [vmem:[#allocation5 + $0x720] sm:$0xff]
    %v295 = vld [vmem:[#allocation5 + $0x728] sm:$0xff]
    %v296 = vld [vmem:[#allocation5 + $0x730] sm:$0xff]
    %v297 = vld [vmem:[#allocation5 + $0x738] sm:$0xff]
    %v298 = vld [vmem:[#allocation5 + $0x740] sm:$0xff]
    %v299 = vld [vmem:[#allocation5 + $0x748] sm:$0xff]
    %v300 = vld [vmem:[#allocation5 + $0x750] sm:$0xff]
    %v301 = vld [vmem:[#allocation5 + $0x758] sm:$0xff]
    %v302 = vld [vmem:[#allocation5 + $0x760] sm:$0xff]
    %v303 = vld [vmem:[#allocation5 + $0x768] sm:$0xff]
    %v304 = vld [vmem:[#allocation5 + $0x770] sm:$0xff]
    %v305 = vld [vmem:[#allocation5 + $0x778] sm:$0xff]
    %v306 = vld [vmem:[#allocation5 + $0x780] sm:$0xff]
    %v307 = vld [vmem:[#allocation5 + $0x788] sm:$0xff]
    %v308 = vld [vmem:[#allocation5 + $0x790] sm:$0xff]
    %v309 = vld [vmem:[#allocation5 + $0x798] sm:$0xff]
    %v310 = vld [vmem:[#allocation5 + $0x7a0] sm:$0xff]
    %v311 = vld [vmem:[#allocation5 + $0x7a8] sm:$0xff]
    %v312 = vld [vmem:[#allocation5 + $0x7b0] sm:$0xff]
    %v313 = vld [vmem:[#allocation5 + $0x7b8] sm:$0xff]
    %v314 = vld [vmem:[#allocation5 + $0x7c0] sm:$0xff]
    %v315 = vld [vmem:[#allocation5 + $0x7c8] sm:$0xff]
    %v316 = vld [vmem:[#allocation5 + $0x7d0] sm:$0xff]
    %v317 = vld [vmem:[#allocation5 + $0x7d8] sm:$0xff]
    %v318 = vld [vmem:[#allocation5 + $0x7e0] sm:$0xff]
    %v319 = vld [vmem:[#allocation5 + $0x7e8] sm:$0xff]
    %v320 = vld [vmem:[#allocation5 + $0x7f0] sm:$0xff]
    %v321 = vld [vmem:[#allocation5 + $0x7f8] sm:$0xff]
    %v322 = vpack.c.bf16 %v70, %v66
    %v323 = vpack.c.bf16 %v71, %v67
    %v324 = vpack.c.bf16 %v72, %v68
    %v325 = vpack.c.bf16 %v73, %v69
    %v326 = vpack.c.bf16 %v78, %v74
    %v327 = vpack.c.bf16 %v79, %v75
    %v328 = vpack.c.bf16 %v80, %v76
    %v329 = vpack.c.bf16 %v81, %v77
    %v330 = vpack.c.bf16 %v86, %v82
    %v331 = vpack.c.bf16 %v87, %v83
    %v332 = vpack.c.bf16 %v88, %v84
    %v333 = vpack.c.bf16 %v89, %v85
    %v334 = vpack.c.bf16 %v94, %v90
    %v335 = vpack.c.bf16 %v95, %v91
    %v336 = vpack.c.bf16 %v96, %v92
    %v337 = vpack.c.bf16 %v97, %v93
    %v338 = vpack.c.bf16 %v102, %v98
    %v339 = vpack.c.bf16 %v103, %v99
    %v340 = vpack.c.bf16 %v104, %v100
    %v341 = vpack.c.bf16 %v105, %v101
    %v342 = vpack.c.bf16 %v110, %v106
    %v343 = vpack.c.bf16 %v111, %v107
    %v344 = vpack.c.bf16 %v112, %v108
    %v345 = vpack.c.bf16 %v113, %v109
    %v346 = vpack.c.bf16 %v118, %v114
    %v347 = vpack.c.bf16 %v119, %v115
    %v348 = vpack.c.bf16 %v120, %v116
    %v349 = vpack.c.bf16 %v121, %v117
    %v350 = vpack.c.bf16 %v126, %v122
    %v351 = vpack.c.bf16 %v127, %v123
    %v352 = vpack.c.bf16 %v128, %v124
    %v353 = vpack.c.bf16 %v129, %v125
    %v354 = vpack.c.bf16 %v134, %v130
    %v355 = vpack.c.bf16 %v135, %v131
    %v356 = vpack.c.bf16 %v136, %v132
    %v357 = vpack.c.bf16 %v137, %v133
    %v358 = vpack.c.bf16 %v142, %v138
    %v359 = vpack.c.bf16 %v143, %v139
    %v360 = vpack.c.bf16 %v144, %v140
    %v361 = vpack.c.bf16 %v145, %v141
    %v362 = vpack.c.bf16 %v150, %v146
    %v363 = vpack.c.bf16 %v151, %v147
    %v364 = vpack.c.bf16 %v152, %v148
    %v365 = vpack.c.bf16 %v153, %v149
    %v366 = vpack.c.bf16 %v158, %v154
    %v367 = vpack.c.bf16 %v159, %v155
    %v368 = vpack.c.bf16 %v160, %v156
    %v369 = vpack.c.bf16 %v161, %v157
    %v370 = vpack.c.bf16 %v166, %v162
    %v371 = vpack.c.bf16 %v167, %v163
    %v372 = vpack.c.bf16 %v168, %v164
    %v373 = vpack.c.bf16 %v169, %v165
    %v374 = vpack.c.bf16 %v174, %v170
    %v375 = vpack.c.bf16 %v175, %v171
    %v376 = vpack.c.bf16 %v176, %v172
    %v377 = vpack.c.bf16 %v177, %v173
    %v378 = vpack.c.bf16 %v182, %v178
    %v379 = vpack.c.bf16 %v183, %v179
    %v380 = vpack.c.bf16 %v184, %v180
    %v381 = vpack.c.bf16 %v185, %v181
    %v382 = vpack.c.bf16 %v190, %v186
    %v383 = vpack.c.bf16 %v191, %v187
    %v384 = vpack.c.bf16 %v192, %v188
    %v385 = vpack.c.bf16 %v193, %v189
    %v386 = vpack.c.bf16 %v198, %v194
    %v387 = vpack.c.bf16 %v199, %v195
    %v388 = vpack.c.bf16 %v200, %v196
    %v389 = vpack.c.bf16 %v201, %v197
    %v390 = vpack.c.bf16 %v206, %v202
    %v391 = vpack.c.bf16 %v207, %v203
    %v392 = vpack.c.bf16 %v208, %v204
    %v393 = vpack.c.bf16 %v209, %v205
    %v394 = vpack.c.bf16 %v214, %v210
    %v395 = vpack.c.bf16 %v215, %v211
    %v396 = vpack.c.bf16 %v216, %v212
    %v397 = vpack.c.bf16 %v217, %v213
    %v398 = vpack.c.bf16 %v222, %v218
    %v399 = vpack.c.bf16 %v223, %v219
    %v400 = vpack.c.bf16 %v224, %v220
    %v401 = vpack.c.bf16 %v225, %v221
    %v402 = vpack.c.bf16 %v230, %v226
    %v403 = vpack.c.bf16 %v231, %v227
    %v404 = vpack.c.bf16 %v232, %v228
    %v405 = vpack.c.bf16 %v233, %v229
    %v406 = vpack.c.bf16 %v238, %v234
    %v407 = vpack.c.bf16 %v239, %v235
    %v408 = vpack.c.bf16 %v240, %v236
    %v409 = vpack.c.bf16 %v241, %v237
    %v410 = vpack.c.bf16 %v246, %v242
    %v411 = vpack.c.bf16 %v247, %v243
    %v412 = vpack.c.bf16 %v248, %v244
    %v413 = vpack.c.bf16 %v249, %v245
    %v414 = vpack.c.bf16 %v254, %v250
    %v415 = vpack.c.bf16 %v255, %v251
    %v416 = vpack.c.bf16 %v256, %v252
    %v417 = vpack.c.bf16 %v257, %v253
    %v418 = vpack.c.bf16 %v262, %v258
    %v419 = vpack.c.bf16 %v263, %v259
    %v420 = vpack.c.bf16 %v264, %v260
    %v421 = vpack.c.bf16 %v265, %v261
    %v422 = vpack.c.bf16 %v270, %v266
    %v423 = vpack.c.bf16 %v271, %v267
    %v424 = vpack.c.bf16 %v272, %v268
    %v425 = vpack.c.bf16 %v273, %v269
    %v426 = vpack.c.bf16 %v278, %v274
    %v427 = vpack.c.bf16 %v279, %v275
    %v428 = vpack.c.bf16 %v280, %v276
    %v429 = vpack.c.bf16 %v281, %v277
    %v430 = vpack.c.bf16 %v286, %v282
    %v431 = vpack.c.bf16 %v287, %v283
    %v432 = vpack.c.bf16 %v288, %v284
    %v433 = vpack.c.bf16 %v289, %v285
    %v434 = vpack.c.bf16 %v294, %v290
    %v435 = vpack.c.bf16 %v295, %v291
    %v436 = vpack.c.bf16 %v296, %v292
    %v437 = vpack.c.bf16 %v297, %v293
    %v438 = vpack.c.bf16 %v302, %v298
    %v439 = vpack.c.bf16 %v303, %v299
    %v440 = vpack.c.bf16 %v304, %v300
    %v441 = vpack.c.bf16 %v305, %v301
    %v442 = vpack.c.bf16 %v310, %v306
    %v443 = vpack.c.bf16 %v311, %v307
    %v444 = vpack.c.bf16 %v312, %v308
    %v445 = vpack.c.bf16 %v313, %v309
    %v446 = vpack.c.bf16 %v318, %v314
    %v447 = vpack.c.bf16 %v319, %v315
    %v448 = vpack.c.bf16 %v320, %v316
    %v449 = vpack.c.bf16 %v321, %v317
    %v450 = vld [vmem:[#allocation7] sm:$0xf]
    %v452 = vlaneseq
    %v453 = vshrl.u32 %v452, 7
    %v454 = vsub.s32 0, %v453
    %v455 = vrot.slane %v450, %v454
    %v456 = vlaneseq
    %v457 = vshrl.u32 %v456, 7
    %v458 = vsub.s32 1, %v457
    %v459 = vrot.slane %v450, %v458
    %v460 = vlaneseq
    %v461 = vshrl.u32 %v460, 7
    %v462 = vsub.s32 2, %v461
    %v463 = vrot.slane %v450, %v462
    %v464 = vlaneseq
    %v465 = vshrl.u32 %v464, 7
    %v466 = vsub.s32 3, %v465
    %v467 = vrot.slane %v450, %v466
    %472 = vmatprep.subr.bf16.mxu0 %v351
    %473 = vmatpush1.bf16.msra.mxu0 %v350
    %474 = vmatprep.subr.bf16.mxu0 %v347
    %475 = vmatpush1.bf16.msra.mxu0 %v346
    %476 = vmatprep.subr.bf16.mxu0 %v343
    %477 = vmatpush1.bf16.msra.mxu0 %v342
    %478 = vmatprep.subr.bf16.mxu0 %v339
    %479 = vmatpush1.bf16.msra.mxu0 %v338
    %480 = vmatprep.subr.bf16.mxu0 %v335
    %481 = vmatpush1.bf16.msra.mxu0 %v334
    %482 = vmatprep.subr.bf16.mxu0 %v331
    %483 = vmatpush1.bf16.msra.mxu0 %v330
    %484 = vmatprep.subr.bf16.mxu0 %v327
    %485 = vmatpush1.bf16.msra.mxu0 %v326
    %486 = vmatprep.subr.bf16.mxu0 %v323
    %487 = vmatpush1.bf16.msra.mxu0 %v322
    %488 = vmatprep.subr.bf16.mxu0 %v383
    %489 = vmatpush2.bf16.msra.mxu0 %v382
    %490 = vmatprep.subr.bf16.mxu0 %v379
    %491 = vmatpush2.bf16.msra.mxu0 %v378
    %492 = vmatprep.subr.bf16.mxu0 %v375
    %493 = vmatpush2.bf16.msra.mxu0 %v374
    %494 = vmatprep.subr.bf16.mxu0 %v371
    %495 = vmatpush2.bf16.msra.mxu0 %v370
    %496 = vmatprep.subr.bf16.mxu0 %v367
    %497 = vmatpush2.bf16.msra.mxu0 %v366
    %498 = vmatprep.subr.bf16.mxu0 %v363
    %499 = vmatpush2.bf16.msra.mxu0 %v362
    %500 = vmatprep.subr.bf16.mxu0 %v359
    %501 = vmatpush2.bf16.msra.mxu0 %v358
    %502 = vmatprep.subr.bf16.mxu0 %v355
    %503 = vmatpush2.bf16.msra.mxu0 %v354
    %504 = vmatprep.mubr.bf16.mxu0 %v63
    %505 = vmatmul.mubr.bf16.gmra.mxu0 %v62
    %v506 = vpop.f32.mrf.mxu0
    %v507 = vadd.f32 %v455, %v506
    %v508 = vpop.f32.mrf.mxu0
    %v509 = vadd.f32 %v459, %v508
    %v510 = vpop.f32.mrf.mxu0
    %v511 = vadd.f32 %v455, %v510
    %v512 = vpop.f32.mrf.mxu0
    %v513 = vadd.f32 %v459, %v512
    %514 = vdwg.mxu0
    %515 = vmatprep.subr.bf16.mxu0 %v415
    %516 = vmatpush1.bf16.msra.mxu0 %v414
    %517 = vmatprep.subr.bf16.mxu0 %v411
    %518 = vmatpush1.bf16.msra.mxu0 %v410
    %519 = vmatprep.subr.bf16.mxu0 %v407
    %520 = vmatpush1.bf16.msra.mxu0 %v406
    %521 = vmatprep.subr.bf16.mxu0 %v403
    %522 = vmatpush1.bf16.msra.mxu0 %v402
    %523 = vmatprep.subr.bf16.mxu0 %v399
    %524 = vmatpush1.bf16.msra.mxu0 %v398
    %525 = vmatprep.subr.bf16.mxu0 %v395
    %526 = vmatpush1.bf16.msra.mxu0 %v394
    %527 = vmatprep.subr.bf16.mxu0 %v391
    %528 = vmatpush1.bf16.msra.mxu0 %v390
    %529 = vmatprep.subr.bf16.mxu0 %v387
    %530 = vmatpush1.bf16.msra.mxu0 %v386
    %531 = vmatprep.subr.bf16.mxu0 %v447
    %532 = vmatpush2.bf16.msra.mxu0 %v446
    %533 = vmatprep.subr.bf16.mxu0 %v443
    %534 = vmatpush2.bf16.msra.mxu0 %v442
    %535 = vmatprep.subr.bf16.mxu0 %v439
    %536 = vmatpush2.bf16.msra.mxu0 %v438
    %537 = vmatprep.subr.bf16.mxu0 %v435
    %538 = vmatpush2.bf16.msra.mxu0 %v434
    %539 = vmatprep.subr.bf16.mxu0 %v431
    %540 = vmatpush2.bf16.msra.mxu0 %v430
    %541 = vmatprep.subr.bf16.mxu0 %v427
    %542 = vmatpush2.bf16.msra.mxu0 %v426
    %543 = vmatprep.subr.bf16.mxu0 %v423
    %544 = vmatpush2.bf16.msra.mxu0 %v422
    %545 = vmatprep.subr.bf16.mxu0 %v419
    %546 = vmatpush2.bf16.msra.mxu0 %v418
    %547 = vmatprep.mubr.bf16.mxu0 %v65
    %548 = vmatmul.mubr.bf16.gmra.mxu0 %v64
    %v549 = vpop.f32.mrf.mxu0
    %v550 = vadd.f32 %v507, %v549
    %v551 = vpop.f32.mrf.mxu0
    %v552 = vadd.f32 %v509, %v551
    %v553 = vpop.f32.mrf.mxu0
    %v554 = vadd.f32 %v511, %v553
    %v555 = vpop.f32.mrf.mxu0
    %v556 = vadd.f32 %v513, %v555
    %557 = vdwg.mxu0
    %558 = vmatprep.subr.bf16.mxu0 %v353
    %559 = vmatpush1.bf16.msra.mxu0 %v352
    %560 = vmatprep.subr.bf16.mxu0 %v349
    %561 = vmatpush1.bf16.msra.mxu0 %v348
    %562 = vmatprep.subr.bf16.mxu0 %v345
    %563 = vmatpush1.bf16.msra.mxu0 %v344
    %564 = vmatprep.subr.bf16.mxu0 %v341
    %565 = vmatpush1.bf16.msra.mxu0 %v340
    %566 = vmatprep.subr.bf16.mxu0 %v337
    %567 = vmatpush1.bf16.msra.mxu0 %v336
    %568 = vmatprep.subr.bf16.mxu0 %v333
    %569 = vmatpush1.bf16.msra.mxu0 %v332
    %570 = vmatprep.subr.bf16.mxu0 %v329
    %571 = vmatpush1.bf16.msra.mxu0 %v328
    %572 = vmatprep.subr.bf16.mxu0 %v325
    %573 = vmatpush1.bf16.msra.mxu0 %v324
    %574 = vmatprep.subr.bf16.mxu0 %v385
    %575 = vmatpush2.bf16.msra.mxu0 %v384
    %576 = vmatprep.subr.bf16.mxu0 %v381
    %577 = vmatpush2.bf16.msra.mxu0 %v380
    %578 = vmatprep.subr.bf16.mxu0 %v377
    %579 = vmatpush2.bf16.msra.mxu0 %v376
    %580 = vmatprep.subr.bf16.mxu0 %v373
    %581 = vmatpush2.bf16.msra.mxu0 %v372
    %582 = vmatprep.subr.bf16.mxu0 %v369
    %583 = vmatpush2.bf16.msra.mxu0 %v368
    %584 = vmatprep.subr.bf16.mxu0 %v365
    %585 = vmatpush2.bf16.msra.mxu0 %v364
    %586 = vmatprep.subr.bf16.mxu0 %v361
    %587 = vmatpush2.bf16.msra.mxu0 %v360
    %588 = vmatprep.subr.bf16.mxu0 %v357
    %589 = vmatpush2.bf16.msra.mxu0 %v356
    %590 = vmatprep.mubr.bf16.mxu0 %v63
    %591 = vmatmul.mubr.bf16.gmra.mxu0 %v62
    %v592 = vpop.f32.mrf.mxu0
    %v593 = vadd.f32 %v463, %v592
    %v594 = vpop.f32.mrf.mxu0
    %v595 = vadd.f32 %v467, %v594
    %v596 = vpop.f32.mrf.mxu0
    %v597 = vadd.f32 %v463, %v596
    %v598 = vpop.f32.mrf.mxu0
    %v599 = vadd.f32 %v467, %v598
    %600 = vdwg.mxu0
    %601 = vmatprep.subr.bf16.mxu0 %v417
    %602 = vmatpush1.bf16.msra.mxu0 %v416
    %603 = vmatprep.subr.bf16.mxu0 %v413
    %604 = vmatpush1.bf16.msra.mxu0 %v412
    %605 = vmatprep.subr.bf16.mxu0 %v409
    %606 = vmatpush1.bf16.msra.mxu0 %v408
    %607 = vmatprep.subr.bf16.mxu0 %v405
    %608 = vmatpush1.bf16.msra.mxu0 %v404
    %609 = vmatprep.subr.bf16.mxu0 %v401
    %610 = vmatpush1.bf16.msra.mxu0 %v400
    %611 = vmatprep.subr.bf16.mxu0 %v397
    %612 = vmatpush1.bf16.msra.mxu0 %v396
    %613 = vmatprep.subr.bf16.mxu0 %v393
    %614 = vmatpush1.bf16.msra.mxu0 %v392
    %615 = vmatprep.subr.bf16.mxu0 %v389
    %616 = vmatpush1.bf16.msra.mxu0 %v388
    %617 = vmatprep.subr.bf16.mxu0 %v449
    %618 = vmatpush2.bf16.msra.mxu0 %v448
    %619 = vmatprep.subr.bf16.mxu0 %v445
    %620 = vmatpush2.bf16.msra.mxu0 %v444
    %621 = vmatprep.subr.bf16.mxu0 %v441
    %622 = vmatpush2.bf16.msra.mxu0 %v440
    %623 = vmatprep.subr.bf16.mxu0 %v437
    %624 = vmatpush2.bf16.msra.mxu0 %v436
    %625 = vmatprep.subr.bf16.mxu0 %v433
    %626 = vmatpush2.bf16.msra.mxu0 %v432
    %627 = vmatprep.subr.bf16.mxu0 %v429
    %628 = vmatpush2.bf16.msra.mxu0 %v428
    %629 = vmatprep.subr.bf16.mxu0 %v425
    %630 = vmatpush2.bf16.msra.mxu0 %v424
    %631 = vmatprep.subr.bf16.mxu0 %v421
    %632 = vmatpush2.bf16.msra.mxu0 %v420
    %633 = vmatprep.mubr.bf16.mxu0 %v65
    %634 = vmatmul.mubr.bf16.gmra.mxu0 %v64
    %v635 = vpop.f32.mrf.mxu0
    %v636 = vadd.f32 %v593, %v635
    %v637 = vpop.f32.mrf.mxu0
    %v638 = vadd.f32 %v595, %v637
    %v639 = vpop.f32.mrf.mxu0
    %v640 = vadd.f32 %v597, %v639
    %v641 = vpop.f32.mrf.mxu0
    %v642 = vadd.f32 %v599, %v641
    %643 = vdwg.mxu0
    %v644 = vmax.f32 %v550, 0.0
    %v645 = vmax.f32 %v552, 0.0
    %v646 = vmax.f32 %v636, 0.0
    %v647 = vmax.f32 %v638, 0.0
    %v648 = vmax.f32 %v554, 0.0
    %v649 = vmax.f32 %v556, 0.0
    %v650 = vmax.f32 %v640, 0.0
    %v651 = vmax.f32 %v642, 0.0
    %652 = vst [vmem:[#allocation8] sm:$0xff] %v644
    %653 = vst [vmem:[#allocation8 + $0x8] sm:$0xff] %v645
    %654 = vst [vmem:[#allocation8 + $0x10] sm:$0xff] %v646
    %655 = vst [vmem:[#allocation8 + $0x18] sm:$0xff] %v647
    %656 = vst [vmem:[#allocation8 + $0x20] sm:$0xff] %v648
    %657 = vst [vmem:[#allocation8 + $0x28] sm:$0xff] %v649
    %658 = vst [vmem:[#allocation8 + $0x30] sm:$0xff] %v650
    %659 = vst [vmem:[#allocation8 + $0x38] sm:$0xff] %v651
    // Predicated region
    $region26: #{tpu_custom_call.1} parent=1 // pred_check
      _
    $region27: #{tpu_custom_call.1} parent=1 // pred_check_branch
      %661 = sbr.rel (0) target = $region29
    $region28: #{tpu_custom_call.1} parent=1 // pred_region
      %s663 = ssub.s32 1024, 1024
      %664 = vsyncadd [#allocation4], %s663
      %s665 = sshll.u32 [#allocation8], 4
      %s666 = int_to_ptr.vmem [resolvable:$true] %s665
      %671 = dma.vmem_to_hbm [thread:$0]  %s666, 1024, %s3, [#allocation4], 512, 512, 32
    $region29: #{tpu_custom_call.1} parent=1 // pred_fallthru
      _
    // Predicated region
    $region30: #{tpu_custom_call.1} parent=1 // pred_check
      _
    $region31: #{tpu_custom_call.1} parent=1 // pred_check_branch
      %673 = sbr.rel (0) target = $region33
    $region32: #{tpu_custom_call.1} parent=1 // pred_region
      %674 = dma.done [#allocation4], 1024
    $region33: #{tpu_custom_call.1} parent=1 // pred_fallthru
      _
    %675 = vsyncpa [#allocation3], 1
    %676 = vsyncpa [#allocation6], 1
    %677 = vsyncpa [#allocation4], 1

</llo_original>
